<compile_context>
chip_gen: v7x
topology: tpu7x:2x2x1
jax: 0.10.0
libtpu: 0.0.40
codegen_flags: <defaults>
</compile_context>

<pallas_src>
import functools

import jax
import jax.numpy as jnp
from jax.experimental import pallas as pl
from jax.experimental.pallas import tpu as pltpu

OUT_LANES = 128  # one lane-dense output row per position (all anchors packed)


# ----------------------------- Pallas kernel ---------------------------------

def _yolo_head_decode_kernel(feat_ref, prior_ref, w_ref, b_ref, out_ref, *,
                             num_anchors, num_classes, scale_x, scale_y):
    """One grid step == one (image, position-tile) pair, all FPN levels fused.

    feat_ref : (T, C)           neck features for T grid cells
    prior_ref: (T, 16)          [cx, cy, stride, aw/2 * A, ah/2 * A, 0 pad]
    w_ref    : (C, A*(4+NC))    fused 1x1 head weight, columns grouped by attribute:
                                [tx*A, ty*A, cls*(A*NC), tw*A, th*A] (obj dropped)
    b_ref    : (1, A*(4+NC))    fused bias (resident; DMA'd once)
    out_ref  : (T, 128)         packed output row per position:
                                [x1,y1,x2,y2,cls(NC)] per anchor, then zeros
    """
    A, NC = num_anchors, num_classes
    n_sig = 2 * A + NC * A                      # columns that get a sigmoid
    T = feat_ref.shape[0]

    # Single fused MXU matmul producing every anchor's raw predictions at once.
    raw = jnp.dot(feat_ref[...], w_ref[...],
                  preferred_element_type=jnp.float32) + b_ref[...]

    sig = jax.nn.sigmoid(raw[:, :n_sig])        # ONE sigmoid: tx, ty, cls block
    ewh = jnp.exp(raw[:, n_sig:])               # ONE exp: tw, th block

    pri = prior_ref[...]
    cx, cy, st = pri[:, 0:1], pri[:, 1:2], pri[:, 2:3]
    aw2 = pri[:, 3:3 + A]                       # anchor half widths  (T, A)
    ah2 = pri[:, 3 + A:3 + 2 * A]               # anchor half heights (T, A)

    stx, sty = sig[:, 0:A], sig[:, A:2 * A]     # (T, A)
    cls = sig[:, 2 * A:n_sig]                   # (T, A*NC), already final values
    etw, eth = ewh[:, 0:A], ewh[:, A:2 * A]     # (T, A)

    # YOLOBBoxCoder.decode + scale_boxes, vectorized over anchors.
    ctrx = cx + (stx - 0.5) * st
    ctry = cy + (sty - 0.5) * st
    hw = aw2 * etw
    hh = ah2 * eth
    x1 = (ctrx - hw) * scale_x
    y1 = (ctry - hh) * scale_y
    x2 = (ctrx + hw) * scale_x
    y2 = (ctry + hh) * scale_y

    # Assemble the packed 128-lane row and write it with a single dense store.
    parts = []
    for a in range(A):                          # static unroll (A == 3)
        parts += [x1[:, a:a + 1], y1[:, a:a + 1],
                  x2[:, a:a + 1], y2[:, a:a + 1],
                  cls[:, a * NC:(a + 1) * NC]]
    pad = OUT_LANES - A * (4 + NC)
    parts.append(jnp.zeros((T, pad), jnp.float32))      # zero (not garbage) padding
    out_ref[...] = jnp.concatenate(parts, axis=-1)


# ------------------------------- wrapper --------------------------------------

def pack_head_params(w_head, b_head, num_anchors, num_classes):
    """Permute the 1x1 head conv columns from anchor-major [tx,ty,tw,th,obj,cls...]
    per anchor into [tx*A, ty*A, cls*(A*NC), tw*A, th*A]; objectness dropped."""
    A, NC = num_anchors, num_classes
    nat = 5 + NC
    cols = ([a * nat + 0 for a in range(A)] +                      # tx
            [a * nat + 1 for a in range(A)] +                      # ty
            [a * nat + 5 + c for a in range(A) for c in range(NC)] +  # cls
            [a * nat + 2 for a in range(A)] +                      # tw
            [a * nat + 3 for a in range(A)])                       # th
    cols = jnp.asarray(cols, jnp.int32)
    return w_head[:, cols], b_head[:, cols]


def yolo_head_decode_pallas(feat, priors, w_head, b_head, *, num_anchors,
                            num_classes, inv_scale, tile_npos,
                            compute_dtype=jnp.float32):
    """feat: (B, N_pos, C) -> packed (B, N_pad, 128) slab (see kernel docstring)."""
    B, n_pos, C = feat.shape
    A, NC = num_anchors, num_classes
    n_cols = A * (4 + NC)
    assert n_cols <= OUT_LANES
    assert tile_npos % 8 == 0

    w_k, b_k = pack_head_params(w_head, b_head, A, NC)
    # bf16 feat / weight (v6e / v7x option): halves input DMA, native bf16 MXU,
    # f32 accumulation + f32 bias keep the decode math in f32.
    feat_k = feat.astype(compute_dtype)
    w_k = w_k.astype(compute_dtype)
    b_k = b_k.astype(jnp.float32)

    # Pad positions to a multiple of the tile; padded prior rows are zero and the
    # padded output rows are sliced off before anything downstream sees them.
    n_pad = (-(-n_pos // tile_npos)) * tile_npos
    if n_pad != n_pos:
        feat_k = jnp.pad(feat_k, ((0, 0), (0, n_pad - n_pos), (0, 0)))
        priors = jnp.pad(priors, ((0, n_pad - n_pos), (0, 0)))

    kernel = functools.partial(
        _yolo_head_decode_kernel, num_anchors=A, num_classes=NC,
        scale_x=float(inv_scale[0]), scale_y=float(inv_scale[1]))

    packed = pl.pallas_call(
        kernel,
        out_shape=jax.ShapeDtypeStruct((B, n_pad, OUT_LANES), jnp.float32),
        grid_spec=pltpu.PrefetchScalarGridSpec(
            num_scalar_prefetch=0,
            grid=(B, n_pad // tile_npos),
            in_specs=[
                pl.BlockSpec((pl.Squeezed(), tile_npos, C),
                             lambda b, i: (b, i, 0)),
                pl.BlockSpec((tile_npos, priors.shape[1]),
                             lambda b, i: (i, 0)),
                pl.BlockSpec((C, n_cols), lambda b, i: (0, 0)),   # resident weight
                pl.BlockSpec((1, n_cols), lambda b, i: (0, 0)),   # resident bias
            ],
            out_specs=pl.BlockSpec((pl.Squeezed(), tile_npos, OUT_LANES),
                                   lambda b, i: (b, i, 0)),
        ),
        compiler_params=pltpu.CompilerParams(
            dimension_semantics=("parallel", "parallel"),
            vmem_limit_bytes=32 * 1024 * 1024),
    )(feat_k, priors, w_k, b_k)
    return packed, n_pos


def unpack_predictions(packed, n_pos, num_anchors, num_classes):
    """Packed slab -> (boxes (B, N_pos*A, 4), scores (B, N_pos*A, NC)).

    NOTE: production consumers (top-k / NMS) should read `packed` directly to skip
    this extra pass over HBM; it exists only to return the module's output layout.
    """
    A, NC = num_anchors, num_classes
    flat = packed[:, :n_pos, :A * (4 + NC)]
    flat = flat.reshape(packed.shape[0], n_pos * A, 4 + NC)
    return flat[..., :4], flat[..., 4:]


# ------------------------------ glue (plain JAX) ------------------------------

def synth_neck_feature(images_nchw, stride, w_proj, b_proj):
    """Synthetic Darknet+YOLOv3-neck stand-in: stride-pool + 1x1 projection + relu."""
    B, C0, H, W = images_nchw.shape
    hl, wl = H // stride, W // stride
    pooled = images_nchw.reshape(B, C0, hl, stride, wl, stride).mean(axis=(3, 5))
    pooled = jnp.transpose(pooled, (0, 2, 3, 1))                 # NHWC
    feat = jax.nn.relu(pooled @ w_proj + b_proj)                 # (B, hl, wl, C)
    return feat.reshape(B, hl * wl, feat.shape[-1]), (hl, wl)


def build_prior_table(featmap_sizes, strides, base_sizes, prior_cols=16):
    """(sum_l H_l*W_l, 16): [cx, cy, stride, aw/2 per anchor, ah/2 per anchor, 0...]."""
    tables = []
    for (hl, wl), stride, sizes in zip(featmap_sizes, strides, base_sizes):
        ys = (jnp.arange(hl, dtype=jnp.float32) + 0.5) * stride
        xs = (jnp.arange(wl, dtype=jnp.float32) + 0.5) * stride
        cy, cx = jnp.meshgrid(ys, xs, indexing="ij")             # row-major (y, x)
        n = hl * wl
        cols = [cx.reshape(-1), cy.reshape(-1),
                jnp.full((n,), float(stride), jnp.float32)]
        cols += [jnp.full((n,), 0.5 * aw, jnp.float32) for (aw, _) in sizes]
        cols += [jnp.full((n,), 0.5 * ah, jnp.float32) for (_, ah) in sizes]
        while len(cols) < prior_cols:
            cols.append(jnp.zeros((n,), jnp.float32))
        tables.append(jnp.stack(cols, axis=-1))
    return jnp.concatenate(tables, axis=0)


def yolo_v3_r_forward(images_nchw, params, strides, base_sizes, inv_scale,
                      num_classes, tile_npos, compute_dtype=jnp.float32):
    """Returns (prediction_boxes (B, N, 4), prediction_logits (B, N, num_classes))."""
    feats, sizes = [], []
    for stride in strides:
        f, hw = synth_neck_feature(images_nchw, stride,
                                   params["w_proj"], params["b_proj"])
        feats.append(f)
        sizes.append(hw)
    feat_all = jnp.concatenate(feats, axis=1)          # mirrors torch.cat over levels
    priors = build_prior_table(sizes, strides, base_sizes)
    num_anchors = len(base_sizes[0])
    packed, n_pos = yolo_head_decode_pallas(
        feat_all, priors, params["w_head"], params["b_head"],
        num_anchors=num_anchors, num_classes=num_classes,
        inv_scale=inv_scale, tile_npos=tile_npos, compute_dtype=compute_dtype)
    return unpack_predictions(packed, n_pos, num_anchors, num_classes)


def yolo_v3_r_reference(images_nchw, params, strides, base_sizes, inv_scale,
                        num_classes):
    """Pure-JAX reference mirroring the PyTorch module's post-processing."""
    num_anchors = len(base_sizes[0])
    num_attrib = 5 + num_classes
    flatten_preds, mlvl_anchors, flatten_strides = [], [], []
    for stride, sizes in zip(strides, base_sizes):
        feat, (hl, wl) = synth_neck_feature(images_nchw, stride,
                                            params["w_proj"], params["b_proj"])
        pred = jnp.dot(feat, params["w_head"],
                       precision=jax.lax.Precision.HIGHEST) + params["b_head"]
        pred = pred.reshape(pred.shape[0], hl * wl * num_anchors, num_attrib)
        pred = pred.at[..., :2].set(jax.nn.sigmoid(pred[..., :2]))
        flatten_preds.append(pred)
        # mmdet YOLOAnchorGenerator grid priors (xyxy), row order (y, x, anchor)
        ys = jnp.arange(hl, dtype=jnp.float32) * stride
        xs = jnp.arange(wl, dtype=jnp.float32) * stride
        sy, sx = jnp.meshgrid(ys, xs, indexing="ij")
        shifts = jnp.stack([sx.reshape(-1), sy.reshape(-1),
                            sx.reshape(-1), sy.reshape(-1)], axis=-1)
        c = stride / 2.0
        base = jnp.array([[c - 0.5 * aw, c - 0.5 * ah, c + 0.5 * aw, c + 0.5 * ah]
                          for (aw, ah) in sizes], jnp.float32)
        mlvl_anchors.append((shifts[:, None, :] + base[None, :, :]).reshape(-1, 4))
        flatten_strides.append(
            jnp.full((hl * wl * num_anchors,), float(stride), jnp.float32))
    preds = jnp.concatenate(flatten_preds, axis=1)
    anchors = jnp.concatenate(mlvl_anchors, axis=0)[None]
    strides_f = jnp.concatenate(flatten_strides, axis=0)[None, :, None]

    bbox_pred = preds[..., :4]
    cls_scores = jax.nn.sigmoid(preds[..., 5:])
    xy = (anchors[..., :2] + anchors[..., 2:]) * 0.5 \
        + (bbox_pred[..., :2] - 0.5) * strides_f
    wh = (anchors[..., 2:] - anchors[..., :2]) * 0.5 * jnp.exp(bbox_pred[..., 2:4])
    boxes = jnp.concatenate([xy - wh, xy + wh], axis=-1)
    boxes = boxes * jnp.array([inv_scale[0], inv_scale[1],
                               inv_scale[0], inv_scale[1]], jnp.float32)
    return boxes, cls_scores


# ---------------------------------- main --------------------------------------

if __name__ == "__main__":
    B, C_IMG, H, W = 2, 3, 64, 64
    C_FEAT = 32
    NUM_CLASSES = 8
    NUM_ANCHORS = 3
    NUM_ATTRIB = 5 + NUM_CLASSES
    STRIDES = (4, 8, 16)                                  # 16x16, 8x8, 4x4 maps
    BASE_SIZES = (((8.0, 10.0), (12.0, 9.0), (10.0, 14.0)),
                  ((16.0, 20.0), (24.0, 18.0), (20.0, 28.0)),
                  ((32.0, 40.0), (48.0, 36.0), (40.0, 56.0)))
    INV_SCALE = (0.8, 0.75)                               # [1/s for s in scale_factor]
    # Small demo tile (336 positions pad to 384 -> grid (2, 3)). Production: use
    # 512-2048 rows per tile, keeping >= 2 tiles per image so both v7x TensorCores
    # get work when batch == 1.
    TILE_NPOS = 128

    key = jax.random.PRNGKey(0)
    k_img, k1, k2, k3 = jax.random.split(key, 4)
    images = jax.random.normal(k_img, (B, C_IMG, H, W), dtype=jnp.float32)

    params = {
        "w_proj": jax.random.normal(k1, (C_IMG, C_FEAT), jnp.float32) * 0.5,
        "b_proj": jnp.zeros((C_FEAT,), jnp.float32),
        "w_head": jax.random.normal(
            k2, (C_FEAT, NUM_ANCHORS * NUM_ATTRIB), jnp.float32) * 0.2,
        "b_head": jax.random.normal(
            k3, (1, NUM_ANCHORS * NUM_ATTRIB), jnp.float32) * 0.1,
    }

    boxes, logits = yolo_v3_r_forward(images, params, STRIDES, BASE_SIZES,
                                      INV_SCALE, NUM_CLASSES, TILE_NPOS)
    boxes = jax.block_until_ready(boxes)
    logits = jax.block_until_ready(logits)

    ref_boxes, ref_logits = yolo_v3_r_reference(images, params, STRIDES,
                                                BASE_SIZES, INV_SCALE, NUM_CLASSES)

    n_total = (16 * 16 + 8 * 8 + 4 * 4) * NUM_ANCHORS
    assert boxes.shape == (B, n_total, 4)
    assert logits.shape == (B, n_total, NUM_CLASSES)
    assert jnp.allclose(boxes, ref_boxes, atol=5e-2, rtol=5e-3), \
        float(jnp.max(jnp.abs(boxes - ref_boxes)))
    assert jnp.allclose(logits, ref_logits, atol=2e-3, rtol=2e-3), \
        float(jnp.max(jnp.abs(logits - ref_logits)))

    # v6e / v7x option: bf16 feat / head weight (f32 accumulation). Run it once to
    # verify the path compiles & executes; numerics intentionally not tightly
    # asserted here (bf16 inputs widen the tolerance).
    boxes_bf16, logits_bf16 = yolo_v3_r_forward(
        images, params, STRIDES, BASE_SIZES, INV_SCALE, NUM_CLASSES, TILE_NPOS,
        compute_dtype=jnp.bfloat16)
    boxes_bf16 = jax.block_until_ready(boxes_bf16)
    assert boxes_bf16.shape == (B, n_total, 4)
    assert logits_bf16.shape == (B, n_total, NUM_CLASSES)

    print("KERNEL_OK")
</pallas_src>

<mosaic_0001>
module attributes {stable_mosaic.version = 11 : i64} {
  func.func @_yolo_head_decode_kernel(%arg0: i32, %arg1: i32, %arg2: memref<1x128x32xf32, #tpu.memory_space<vmem>>, %arg3: memref<128x16xf32, #tpu.memory_space<vmem>>, %arg4: memref<32x36xf32, #tpu.memory_space<vmem>>, %arg5: memref<1x36xf32, #tpu.memory_space<vmem>>, %arg6: memref<1x128x128xf32, #tpu.memory_space<vmem>>) attributes {dimension_semantics = [#tpu.dimension_semantics<parallel>, #tpu.dimension_semantics<parallel>], iteration_bounds = array<i64: 2, 3>, scalar_prefetch = 0 : i64, scratch_operands = 0 : i64, tpu.core_type = #tpu.core_type<tc>, window_params = [{transform_indices = @transform_0, window_bounds = array<i64: 1, 128, 32>}, {transform_indices = @transform_1, window_bounds = array<i64: 128, 16>}, {pipeline_mode = #tpu.pipeline_mode<synchronous>, transform_indices = @transform_2, window_bounds = array<i64: 32, 36>}, {pipeline_mode = #tpu.pipeline_mode<synchronous>, transform_indices = @transform_3, window_bounds = array<i64: 1, 36>}, {transform_indices = @transform_4, window_bounds = array<i64: 1, 128, 128>}]} {
    %c0 = arith.constant 0 : index
    %c0_0 = arith.constant 0 : index
    %c0_1 = arith.constant 0 : index
    %0 = vector.load %arg2[%c0, %c0_0, %c0_1] : memref<1x128x32xf32, #tpu.memory_space<vmem>>, vector<1x128x32xf32>
    %1 = vector.shape_cast %0 : vector<1x128x32xf32> to vector<128x32xf32>
    %c0_2 = arith.constant 0 : index
    %c0_3 = arith.constant 0 : index
    %2 = vector.load %arg4[%c0_2, %c0_3] : memref<32x36xf32, #tpu.memory_space<vmem>>, vector<32x36xf32>
    %cst = arith.constant dense<0.000000e+00> : vector<128x36xf32>
    %3 = tpu.matmul %1, %2, %cst {dimension_numbers = #tpu.dot_dimension_numbers<[1], [0], [0], [1], [0, 0, 1, 1], [], []>} : vector<128x32xf32>, vector<32x36xf32>, vector<128x36xf32> -> vector<128x36xf32>
    %c0_4 = arith.constant 0 : index
    %c0_5 = arith.constant 0 : index
    %4 = vector.load %arg5[%c0_4, %c0_5] : memref<1x36xf32, #tpu.memory_space<vmem>>, vector<1x36xf32>
    %5 = vector.broadcast %4 : vector<1x36xf32> to vector<128x36xf32>
    %6 = arith.addf %3, %5 : vector<128x36xf32>
    %7 = vector.extract_strided_slice %6 {offsets = [0, 0], sizes = [128, 30], strides = [1, 1]} : vector<128x36xf32> to vector<128x30xf32>
    %8 = arith.negf %7 : vector<128x30xf32>
    %9 = math.exp %8 : vector<128x30xf32>
    %cst_6 = arith.constant 1.000000e+00 : f32
    %10 = vector.broadcast %cst_6 : f32 to vector<128x30xf32>
    %11 = arith.addf %10, %9 : vector<128x30xf32>
    %12 = arith.divf %10, %11 : vector<128x30xf32>
    %13 = vector.extract_strided_slice %6 {offsets = [0, 30], sizes = [128, 6], strides = [1, 1]} : vector<128x36xf32> to vector<128x6xf32>
    %14 = math.exp %13 : vector<128x6xf32>
    %c0_7 = arith.constant 0 : index
    %c0_8 = arith.constant 0 : index
    %15 = vector.load %arg3[%c0_7, %c0_8] : memref<128x16xf32, #tpu.memory_space<vmem>>, vector<128x16xf32>
    %16 = vector.extract_strided_slice %15 {offsets = [0, 0], sizes = [128, 1], strides = [1, 1]} : vector<128x16xf32> to vector<128x1xf32>
    %17 = vector.extract_strided_slice %15 {offsets = [0, 1], sizes = [128, 1], strides = [1, 1]} : vector<128x16xf32> to vector<128x1xf32>
    %18 = vector.extract_strided_slice %15 {offsets = [0, 2], sizes = [128, 1], strides = [1, 1]} : vector<128x16xf32> to vector<128x1xf32>
    %19 = vector.extract_strided_slice %15 {offsets = [0, 3], sizes = [128, 3], strides = [1, 1]} : vector<128x16xf32> to vector<128x3xf32>
    %20 = vector.extract_strided_slice %15 {offsets = [0, 6], sizes = [128, 3], strides = [1, 1]} : vector<128x16xf32> to vector<128x3xf32>
    %21 = vector.extract_strided_slice %12 {offsets = [0, 0], sizes = [128, 3], strides = [1, 1]} : vector<128x30xf32> to vector<128x3xf32>
    %22 = vector.extract_strided_slice %12 {offsets = [0, 3], sizes = [128, 3], strides = [1, 1]} : vector<128x30xf32> to vector<128x3xf32>
    %23 = vector.extract_strided_slice %12 {offsets = [0, 6], sizes = [128, 24], strides = [1, 1]} : vector<128x30xf32> to vector<128x24xf32>
    %24 = vector.extract_strided_slice %14 {offsets = [0, 0], sizes = [128, 3], strides = [1, 1]} : vector<128x6xf32> to vector<128x3xf32>
    %25 = vector.extract_strided_slice %14 {offsets = [0, 3], sizes = [128, 3], strides = [1, 1]} : vector<128x6xf32> to vector<128x3xf32>
    %cst_9 = arith.constant 5.000000e-01 : f32
    %26 = vector.broadcast %cst_9 : f32 to vector<128x3xf32>
    %27 = arith.subf %21, %26 : vector<128x3xf32>
    %28 = vector.broadcast %18 : vector<128x1xf32> to vector<128x3xf32>
    %29 = arith.mulf %27, %28 : vector<128x3xf32>
    %30 = vector.broadcast %16 : vector<128x1xf32> to vector<128x3xf32>
    %31 = arith.addf %30, %29 : vector<128x3xf32>
    %cst_10 = arith.constant 5.000000e-01 : f32
    %32 = vector.broadcast %cst_10 : f32 to vector<128x3xf32>
    %33 = arith.subf %22, %32 : vector<128x3xf32>
    %34 = vector.broadcast %18 : vector<128x1xf32> to vector<128x3xf32>
    %35 = arith.mulf %33, %34 : vector<128x3xf32>
    %36 = vector.broadcast %17 : vector<128x1xf32> to vector<128x3xf32>
    %37 = arith.addf %36, %35 : vector<128x3xf32>
    %38 = arith.mulf %19, %24 : vector<128x3xf32>
    %39 = arith.mulf %20, %25 : vector<128x3xf32>
    %40 = arith.subf %31, %38 : vector<128x3xf32>
    %cst_11 = arith.constant 8.000000e-01 : f32
    %41 = vector.broadcast %cst_11 : f32 to vector<128x3xf32>
    %42 = arith.mulf %40, %41 : vector<128x3xf32>
    %43 = arith.subf %37, %39 : vector<128x3xf32>
    %cst_12 = arith.constant 7.500000e-01 : f32
    %44 = vector.broadcast %cst_12 : f32 to vector<128x3xf32>
    %45 = arith.mulf %43, %44 : vector<128x3xf32>
    %46 = arith.addf %31, %38 : vector<128x3xf32>
    %cst_13 = arith.constant 8.000000e-01 : f32
    %47 = vector.broadcast %cst_13 : f32 to vector<128x3xf32>
    %48 = arith.mulf %46, %47 : vector<128x3xf32>
    %49 = arith.addf %37, %39 : vector<128x3xf32>
    %cst_14 = arith.constant 7.500000e-01 : f32
    %50 = vector.broadcast %cst_14 : f32 to vector<128x3xf32>
    %51 = arith.mulf %49, %50 : vector<128x3xf32>
    %52 = vector.extract_strided_slice %42 {offsets = [0, 0], sizes = [128, 1], strides = [1, 1]} : vector<128x3xf32> to vector<128x1xf32>
    %53 = vector.extract_strided_slice %45 {offsets = [0, 0], sizes = [128, 1], strides = [1, 1]} : vector<128x3xf32> to vector<128x1xf32>
    %54 = vector.extract_strided_slice %48 {offsets = [0, 0], sizes = [128, 1], strides = [1, 1]} : vector<128x3xf32> to vector<128x1xf32>
    %55 = vector.extract_strided_slice %51 {offsets = [0, 0], sizes = [128, 1], strides = [1, 1]} : vector<128x3xf32> to vector<128x1xf32>
    %56 = vector.extract_strided_slice %23 {offsets = [0, 0], sizes = [128, 8], strides = [1, 1]} : vector<128x24xf32> to vector<128x8xf32>
    %57 = vector.extract_strided_slice %42 {offsets = [0, 1], sizes = [128, 1], strides = [1, 1]} : vector<128x3xf32> to vector<128x1xf32>
    %58 = vector.extract_strided_slice %45 {offsets = [0, 1], sizes = [128, 1], strides = [1, 1]} : vector<128x3xf32> to vector<128x1xf32>
    %59 = vector.extract_strided_slice %48 {offsets = [0, 1], sizes = [128, 1], strides = [1, 1]} : vector<128x3xf32> to vector<128x1xf32>
    %60 = vector.extract_strided_slice %51 {offsets = [0, 1], sizes = [128, 1], strides = [1, 1]} : vector<128x3xf32> to vector<128x1xf32>
    %61 = vector.extract_strided_slice %23 {offsets = [0, 8], sizes = [128, 8], strides = [1, 1]} : vector<128x24xf32> to vector<128x8xf32>
    %62 = vector.extract_strided_slice %42 {offsets = [0, 2], sizes = [128, 1], strides = [1, 1]} : vector<128x3xf32> to vector<128x1xf32>
    %63 = vector.extract_strided_slice %45 {offsets = [0, 2], sizes = [128, 1], strides = [1, 1]} : vector<128x3xf32> to vector<128x1xf32>
    %64 = vector.extract_strided_slice %48 {offsets = [0, 2], sizes = [128, 1], strides = [1, 1]} : vector<128x3xf32> to vector<128x1xf32>
    %65 = vector.extract_strided_slice %51 {offsets = [0, 2], sizes = [128, 1], strides = [1, 1]} : vector<128x3xf32> to vector<128x1xf32>
    %66 = vector.extract_strided_slice %23 {offsets = [0, 16], sizes = [128, 8], strides = [1, 1]} : vector<128x24xf32> to vector<128x8xf32>
    %cst_15 = arith.constant 0.000000e+00 : f32
    %67 = vector.broadcast %cst_15 : f32 to vector<128x92xf32>
    %68 = tpu.concatenate %52, %53, %54, %55, %56, %57, %58, %59, %60, %61, %62, %63, %64, %65, %66, %67 in 1 : vector<128x1xf32>, vector<128x1xf32>, vector<128x1xf32>, vector<128x1xf32>, vector<128x8xf32>, vector<128x1xf32>, vector<128x1xf32>, vector<128x1xf32>, vector<128x1xf32>, vector<128x8xf32>, vector<128x1xf32>, vector<128x1xf32>, vector<128x1xf32>, vector<128x1xf32>, vector<128x8xf32>, vector<128x92xf32> -> vector<128x128xf32>
    %c0_16 = arith.constant 0 : index
    %c0_17 = arith.constant 0 : index
    %c0_18 = arith.constant 0 : index
    %69 = vector.load %arg6[%c0_16, %c0_17, %c0_18] : memref<1x128x128xf32, #tpu.memory_space<vmem>>, vector<1x128x128xf32>
    %70 = vector.shape_cast %69 : vector<1x128x128xf32> to vector<128x128xf32>
    %71 = vector.shape_cast %68 : vector<128x128xf32> to vector<1x128x128xf32>
    tpu.vector_store %arg6[%c0_16, %c0_17, %c0_18], %71 {strides = array<i32>} : memref<1x128x128xf32, #tpu.memory_space<vmem>>, vector<1x128x128xf32>,
    return
  }
  func.func @transform_0(%arg0: i32, %arg1: i32) -> (i32, i32, i32) {
    %c0_i32 = arith.constant 0 : i32
    %c0_i32_0 = arith.constant 0 : i32
    return %arg0, %arg1, %c0_i32 : i32, i32, i32
  }
  func.func @transform_1(%arg0: i32, %arg1: i32) -> (i32, i32) {
    %c0_i32 = arith.constant 0 : i32
    %c0_i32_0 = arith.constant 0 : i32
    return %arg1, %c0_i32 : i32, i32
  }
  func.func @transform_2(%arg0: i32, %arg1: i32) -> (i32, i32) {
    %c0_i32 = arith.constant 0 : i32
    %c0_i32_0 = arith.constant 0 : i32
    %c0_i32_1 = arith.constant 0 : i32
    return %c0_i32, %c0_i32_0 : i32, i32
  }
  func.func @transform_3(%arg0: i32, %arg1: i32) -> (i32, i32) {
    %c0_i32 = arith.constant 0 : i32
    %c0_i32_0 = arith.constant 0 : i32
    %c0_i32_1 = arith.constant 0 : i32
    return %c0_i32, %c0_i32_0 : i32, i32
  }
  func.func @transform_4(%arg0: i32, %arg1: i32) -> (i32, i32, i32) {
    %c0_i32 = arith.constant 0 : i32
    %c0_i32_0 = arith.constant 0 : i32
    return %arg0, %arg1, %c0_i32 : i32, i32, i32
  }
}

</mosaic_0001>

<llo_original>
// kernel: tpu_custom_call.1
$region0: #{tpu_custom_call.1}
  #allocation0 [shape = 'u32[]', space=smem, size = 0x4, offset = 0x4, fixed_abs, tag = 'smem constant byte address 0x4 - core index']
  #allocation1 [shape = 'u32[144,128]{1,0:T(1,128)}', space=vmem, size = 0x12000, scoped, tag = 'internal scratch']
  %s0 = inlined_call_operand.vmem [shape: f32[2,384,32], index: 0, kind: input, shape index: {}]
  %s1 = inlined_call_operand.vmem [shape: f32[384,16], index: 1, kind: input, shape index: {}]
  %s2 = inlined_call_operand.vmem [shape: f32[32,36], index: 2, kind: input, shape index: {}]
  %s3 = inlined_call_operand.vmem [shape: f32[1,36], index: 3, kind: input, shape index: {}]
  %s4 = inlined_call_operand.hbm [shape: f32[2,384,128], index: 4, kind: output, shape index: {}]
  %s5 = sld [smem:[#allocation0]]
  $region49: #{tpu_custom_call.1} parent=0
    _
  %s7 = ssub.s32 1, %s5
  %s8 = scalar_select 0, %s7, %s5
  $region1: #{tpu_custom_call.1} parent=0
    #allocation2 [shape = 'u8[131072]{0}', space=vmem, size = 0x20000, scoped, tag = 'output window, operand 0']
    #allocation3 [shape = 's32[2]{0}', space=sflag, size = 0x8, scoped, tag = 'scoped memory for tpu_custom_call.1']
    %9 = vsyncpa [#allocation3], 0
    %s10 = scalar_lea.sflag [#allocation3], 1
    %11 = vsyncpa %s10, 0
    loop: start=0, step=1, limit=8
    $region2: #{tpu_custom_call.1} parent=1 // loop_pre_header
      _
    $region3: #{tpu_custom_call.1} parent=1 // loop_header
      %s13 = sphi 0, %s17
      %p14 = scmp.ge.s32.totalorder %s13, 8
      %s20 = sphi 0, %s32
      %s21 = sphi 0, %s28
      %s22 = sphi 0, %s20
      %s23 = sphi 0, %s21
      %s24 = sphi 0, %s22
      %s25 = sphi 0, %s23
      %s37 = sphi 0, %s39
      %s40 = sphi 0, %s37
      %s41 = sphi 0, %s40
      %s57 = sphi 0, %s41
      %s63 = sphi 0, %s65
      %s66 = sphi 0, %s63
      %s67 = sphi 0, %s66
      %s83 = sphi 0, %s67
      %s87 = sphi 0, %s87
      %s89 = sphi 0, %s87
      %s90 = sphi 0, %s89
      %s104 = sphi 0, %s90
      %s108 = sphi 0, %s108
      %s110 = sphi 0, %s108
      %s111 = sphi 0, %s110
      %s125 = sphi 0, %s111
      %s133 = sphi 0, %s135
      %s136 = sphi 0, %s133
      %s137 = sphi 0, %s136
      %s153 = sphi 0, %s137
    $region4: #{tpu_custom_call.1} parent=1 // loop_header_branch
      %16 = sbr.rel (%p14) target = $region8
    $region5: #{tpu_custom_call.1} parent=1 // loop_body
      %s18 = ssub.s32 %s13, 1
      %s19 = ssub.s32 %s13, 2
      %s26 = sadd.s32 1, %s21
      %p27 = scmp.ge.s32.totalorder %s26, 3
      %s28 = scalar_select %p27, 0, %s26
      %s29 = sadd.s32 1, %s20
      %s30 = scalar_select %p27, %s29, %s20
      %p31 = scmp.ge.s32.totalorder %s30, 2
      %s32 = scalar_select %p31, 0, %s30
      %s33 = ssub.s32 %s20, %s32
      %s34 = ssub.s32 %s21, %s28
      %s35 = sor.u32 %s33, %s34
      %p36 = scmp.eq.s32.totalorder %s35, 0
      %s38 = sadd.s32 %s37, 1
      %s39 = scalar_select %p36, %s37, %s38
      %p42 = pneg %p36
      %p43 = scmp.eq.s32.totalorder %s13, 5
      %p44 = por %p42, %p43
      %p45 = scmp.ne.s32.totalorder %s37, %s40
      %p46 = scmp.eq.s32.totalorder %s13, 0
      %p47 = por %p45, %p46
      %p48 = scmp.ne.s32.totalorder %s37, %s40
      %p49 = scmp.eq.s32.totalorder %s18, 5
      %p50 = por %p48, %p49
      %p51 = scmp.ne.s32.totalorder %s40, %s41
      %p52 = scmp.eq.s32.totalorder %s18, 0
      %p53 = por %p51, %p52
      %p54 = scmp.ne.s32.totalorder %s40, %s41
      %p55 = scmp.eq.s32.totalorder %s19, 5
      %p56 = por %p54, %p55
      %p58 = scmp.ne.s32.totalorder %s41, %s57
      %p59 = scmp.eq.s32.totalorder %s19, 0
      %p60 = por %p58, %p59
      %s61 = ssub.s32 %s21, %s28
      %p62 = scmp.eq.s32.totalorder %s61, 0
      %s64 = sadd.s32 %s63, 1
      %s65 = scalar_select %p62, %s63, %s64
      %p68 = pneg %p62
      %p69 = scmp.eq.s32.totalorder %s13, 5
      %p70 = por %p68, %p69
      %p71 = scmp.ne.s32.totalorder %s63, %s66
      %p72 = scmp.eq.s32.totalorder %s13, 0
      %p73 = por %p71, %p72
      %p74 = scmp.ne.s32.totalorder %s63, %s66
      %p75 = scmp.eq.s32.totalorder %s18, 5
      %p76 = por %p74, %p75
      %p77 = scmp.ne.s32.totalorder %s66, %s67
      %p78 = scmp.eq.s32.totalorder %s18, 0
      %p79 = por %p77, %p78
      %p80 = scmp.ne.s32.totalorder %s66, %s67
      %p81 = scmp.eq.s32.totalorder %s19, 5
      %p82 = por %p80, %p81
      %p84 = scmp.ne.s32.totalorder %s67, %s83
      %p85 = scmp.eq.s32.totalorder %s19, 0
      %p86 = por %p84, %p85
      %s88 = sadd.s32 %s87, 1
      %p91 = scmp.eq.s32.totalorder %s13, 5
      %p92 = scmp.ne.s32.totalorder %s87, %s89
      %p93 = scmp.eq.s32.totalorder %s13, 0
      %p94 = por %p92, %p93
      %p95 = scmp.ne.s32.totalorder %s87, %s89
      %p96 = scmp.eq.s32.totalorder %s18, 5
      %p97 = por %p95, %p96
      %p98 = scmp.ne.s32.totalorder %s89, %s90
      %p99 = scmp.eq.s32.totalorder %s18, 0
      %p100 = por %p98, %p99
      %p101 = scmp.ne.s32.totalorder %s89, %s90
      %p102 = scmp.eq.s32.totalorder %s19, 5
      %p103 = por %p101, %p102
      %p105 = scmp.ne.s32.totalorder %s90, %s104
      %p106 = scmp.eq.s32.totalorder %s19, 0
      %p107 = por %p105, %p106
      %s109 = sadd.s32 %s108, 1
      %p112 = scmp.eq.s32.totalorder %s13, 5
      %p113 = scmp.ne.s32.totalorder %s108, %s110
      %p114 = scmp.eq.s32.totalorder %s13, 0
      %p115 = por %p113, %p114
      %p116 = scmp.ne.s32.totalorder %s108, %s110
      %p117 = scmp.eq.s32.totalorder %s18, 5
      %p118 = por %p116, %p117
      %p119 = scmp.ne.s32.totalorder %s110, %s111
      %p120 = scmp.eq.s32.totalorder %s18, 0
      %p121 = por %p119, %p120
      %p122 = scmp.ne.s32.totalorder %s110, %s111
      %p123 = scmp.eq.s32.totalorder %s19, 5
      %p124 = por %p122, %p123
      %p126 = scmp.ne.s32.totalorder %s111, %s125
      %p127 = scmp.eq.s32.totalorder %s19, 0
      %p128 = por %p126, %p127
      %s129 = ssub.s32 %s20, %s32
      %s130 = ssub.s32 %s21, %s28
      %s131 = sor.u32 %s129, %s130
      %p132 = scmp.eq.s32.totalorder %s131, 0
      %s134 = sadd.s32 %s133, 1
      %s135 = scalar_select %p132, %s133, %s134
      %p138 = pneg %p132
      %p139 = scmp.eq.s32.totalorder %s13, 5
      %p140 = por %p138, %p139
      %p141 = scmp.ne.s32.totalorder %s133, %s136
      %p142 = scmp.eq.s32.totalorder %s13, 0
      %p143 = por %p141, %p142
      %p144 = scmp.ne.s32.totalorder %s133, %s136
      %p145 = scmp.eq.s32.totalorder %s18, 5
      %p146 = por %p144, %p145
      %p147 = scmp.ne.s32.totalorder %s136, %s137
      %p148 = scmp.eq.s32.totalorder %s18, 0
      %p149 = por %p147, %p148
      %p150 = scmp.ne.s32.totalorder %s136, %s137
      %p151 = scmp.eq.s32.totalorder %s19, 5
      %p152 = por %p150, %p151
      %p154 = scmp.ne.s32.totalorder %s137, %s153
      %p155 = scmp.eq.s32.totalorder %s19, 0
      %p156 = por %p154, %p155
      %p157 = scmp.le.s32.totalorder 1, %s13
      %p158 = scmp.lt.s32.totalorder %s13, 7
      %p159 = pnand %p157, %p158
      %p160 = pneg %p159
      // Predicated region
      $region9: #{tpu_custom_call.1} parent=5 // pred_check
        _
      $region10: #{tpu_custom_call.1} parent=5 // pred_check_branch
        %162 = sbr.rel (%p159) target = $region12
      $region11: #{tpu_custom_call.1} parent=5 // pred_region
        %s163 = ssub.s32 %s13, 1
        // Predicated region
        $region13: #{tpu_custom_call.1} parent=11 // pred_check
          %p164 = pneg %p100
        $region14: #{tpu_custom_call.1} parent=11 // pred_check_branch
          %166 = sbr.rel (%p164) target = $region16
        $region15: #{tpu_custom_call.1} parent=11 // pred_region
          _
        $region16: #{tpu_custom_call.1} parent=11 // pred_fallthru
          _
        // Predicated region
        $region17: #{tpu_custom_call.1} parent=11 // pred_check
          %p167 = pneg %p121
        $region18: #{tpu_custom_call.1} parent=11 // pred_check_branch
          %169 = sbr.rel (%p167) target = $region20
        $region19: #{tpu_custom_call.1} parent=11 // pred_region
          _
        $region20: #{tpu_custom_call.1} parent=11 // pred_fallthru
          _
      $region12: #{tpu_custom_call.1} parent=5 // pred_fallthru
        _
      %p170 = scmp.lt.s32.totalorder %s13, 6
      // Predicated region
      $region21: #{tpu_custom_call.1} parent=5 // pred_check
        %p171 = pneg %p170
      $region22: #{tpu_custom_call.1} parent=5 // pred_check_branch
        %173 = sbr.rel (%p171) target = $region24
      $region23: #{tpu_custom_call.1} parent=5 // pred_region
        // Predicated region
        $region25: #{tpu_custom_call.1} parent=23 // pred_check
          %p174 = pneg %p47
        $region26: #{tpu_custom_call.1} parent=23 // pred_check_branch
          %176 = sbr.rel (%p174) target = $region28
        $region27: #{tpu_custom_call.1} parent=23 // pred_region
          %s177 = smul.u32 16, %s21
          %p178 = scmp.lt.s32.totalorder %s20, 1
          %s179 = scalar_select %p178, %s20, 1
          %p180 = scmp.lt.s32.totalorder %s177, 47
          %s181 = scalar_select %p180, %s177, 47
          %s182 = smul.addr %s179, 48
          %s183 = sadd.s32 %s181, %s182
          %s184 = smul.addr %s183, 8
          %s185 = scalar_lea.vmem %s0, %s184
          %s186 = smul.u32 16, %s21
        $region28: #{tpu_custom_call.1} parent=23 // pred_fallthru
          _
        // Predicated region
        $region29: #{tpu_custom_call.1} parent=23 // pred_check
          %p187 = pneg %p73
        $region30: #{tpu_custom_call.1} parent=23 // pred_check_branch
          %189 = sbr.rel (%p187) target = $region32
        $region31: #{tpu_custom_call.1} parent=23 // pred_region
          %s190 = smul.u32 16, %s21
          %p191 = scmp.lt.s32.totalorder %s190, 47
          %s192 = scalar_select %p191, %s190, 47
          %s193 = smul.addr %s192, 8
          %s194 = scalar_lea.vmem %s1, %s193
          %s195 = smul.u32 16, %s21
        $region32: #{tpu_custom_call.1} parent=23 // pred_fallthru
          _
      $region24: #{tpu_custom_call.1} parent=5 // pred_fallthru
        _
      %p196 = scmp.le.s32.totalorder 1, %s13
      %p197 = scmp.lt.s32.totalorder %s13, 7
      %p198 = pnand %p196, %p197
      %p199 = pneg %p198
      // Predicated region
      $region33: #{tpu_custom_call.1} parent=5 // pred_check
        _
      $region34: #{tpu_custom_call.1} parent=5 // pred_check_branch
        %201 = sbr.rel (%p198) target = $region36
      $region35: #{tpu_custom_call.1} parent=5 // pred_region
        %s202 = ssub.s32 %s13, 1
        %s203 = smul.u32 16, %s23
        %p204 = scmp.lt.s32.totalorder %s22, 1
        %s205 = scalar_select %p204, %s22, 1
        %p206 = scmp.lt.s32.totalorder %s203, 47
        %s207 = scalar_select %p206, %s203, 47
        %s208 = smul.addr %s205, 48
        %s209 = sadd.s32 %s207, %s208
        %s210 = smul.addr %s209, 8
        %s211 = scalar_lea.vmem %s0, %s210
        %p212 = pneg %p53
        %p213 = pneg %p50
        %s214 = smul.u32 16, %s23
        %p215 = scmp.lt.s32.totalorder %s214, 47
        %s216 = scalar_select %p215, %s214, 47
        %s217 = smul.addr %s216, 8
        %s218 = scalar_lea.vmem %s1, %s217
        %p219 = pneg %p79
        %p220 = pneg %p76
        %p221 = pneg %p100
        %p222 = pneg %p97
        %p223 = pneg %p121
        %p224 = pneg %p118
        %p225 = pneg %p149
        %p226 = pneg %p146
        %s227 = sand.u32 %s136, 1
        %s228 = scalar_lea.sflag [#allocation3], %s227
        %s229 = sand.u32 %s136, 1
        %s230 = smul.addr %s229, 128
        %s231 = scalar_lea.vmem [#allocation2], %s230
        %s232 = smul.u32 16, %s23
        %p233 = scmp.lt.s32.totalorder %s22, 1
        %s234 = scalar_select %p233, %s22, 1
        %p235 = scmp.lt.s32.totalorder %s232, 47
        %s236 = scalar_select %p235, %s232, 47
        %s237 = smul.addr %s234, 48
        %s238 = sadd.s32 %s236, %s237
        %s239 = smul.addr %s238, 8
        %s240 = scalar_lea.vmem %s0, %s239
        %s241 = smul.u32 16, %s23
        %s242 = smul.u32 16, %s23
        %p243 = scmp.lt.s32.totalorder %s242, 47
        %s244 = scalar_select %p243, %s242, 47
        %s245 = smul.addr %s244, 8
        %s246 = scalar_lea.vmem %s1, %s245
        %s247 = smul.u32 16, %s23
        %s248 = smul.u32 16, %s23
        %v249 = vld [vmem:[%s240] sm:$0xff]
        %v250 = vld [vmem:[%s240 + $0x8] sm:$0xff]
        %v251 = vld [vmem:[%s240 + $0x10] sm:$0xff]
        %v252 = vld [vmem:[%s240 + $0x18] sm:$0xff]
        %v253 = vld [vmem:[%s240 + $0x20] sm:$0xff]
        %v254 = vld [vmem:[%s240 + $0x28] sm:$0xff]
        %v255 = vld [vmem:[%s240 + $0x30] sm:$0xff]
        %v256 = vld [vmem:[%s240 + $0x38] sm:$0xff]
        %v257 = vld [vmem:[%s240 + $0x40] sm:$0xff]
        %v258 = vld [vmem:[%s240 + $0x48] sm:$0xff]
        %v259 = vld [vmem:[%s240 + $0x50] sm:$0xff]
        %v260 = vld [vmem:[%s240 + $0x58] sm:$0xff]
        %v261 = vld [vmem:[%s240 + $0x60] sm:$0xff]
        %v262 = vld [vmem:[%s240 + $0x68] sm:$0xff]
        %v263 = vld [vmem:[%s240 + $0x70] sm:$0xff]
        %v264 = vld [vmem:[%s240 + $0x78] sm:$0xff]
        %v265 = vld [vmem:[%s2] sm:$0xff]
        %v266 = vld [vmem:[%s2 + $0x8] sm:$0xff]
        %v267 = vld [vmem:[%s2 + $0x10] sm:$0xff]
        %v268 = vld [vmem:[%s2 + $0x18] sm:$0xff]
        %v269 = vld [vmem:[%s3] sm:$0x1]
        %v271 = vlaneseq
        %v272 = vshrl.u32 %v271, 7
        %v273 = vsub.s32 0, %v272
        %v274 = vrot.slane %v269, %v273
        %vm276 = vcmask 261120
        %v278 = vsel %vm276, %v249, 0
        %v281 = vsel %vm276, %v250, 0
        %v284 = vsel %vm276, %v251, 0
        %v287 = vsel %vm276, %v252, 0
        %v290 = vsel %vm276, %v253, 0
        %v293 = vsel %vm276, %v254, 0
        %v296 = vsel %vm276, %v255, 0
        %v299 = vsel %vm276, %v256, 0
        %v302 = vsel %vm276, %v257, 0
        %v305 = vsel %vm276, %v258, 0
        %v308 = vsel %vm276, %v259, 0
        %v311 = vsel %vm276, %v260, 0
        %v314 = vsel %vm276, %v261, 0
        %v317 = vsel %vm276, %v262, 0
        %v320 = vsel %vm276, %v263, 0
        %v323 = vsel %vm276, %v264, 0
        %325 = vmatprep.subr.mxu0 0.0
        %326 = vmatpush1.msra.mxu0 %v265
        %327 = vmatprep.subr.mxu0 0.0
        %328 = vmatpush1.msra.mxu0 %v266
        %329 = vmatprep.subr.mxu0 0.0
        %330 = vmatpush1.msra.mxu0 %v267
        %331 = vmatprep.subr.mxu0 0.0
        %332 = vmatpush1.msra.mxu0 %v268
        %333 = vmatprep.subr.mxu0 0.0
        %334 = vmatpush1.msra.mxu0 0.0
        %335 = vmatprep.subr.mxu0 0.0
        %336 = vmatpush1.msra.mxu0 0.0
        %337 = vmatprep.subr.mxu0 0.0
        %338 = vmatpush1.msra.mxu0 0.0
        %339 = vmatprep.subr.mxu0 0.0
        %340 = vmatpush1.msra.mxu0 0.0
        %341 = vmatprep.subr.mxu0 0.0
        %342 = vmatpush1.msra.mxu0 0.0
        %343 = vmatprep.subr.mxu0 0.0
        %344 = vmatpush1.msra.mxu0 0.0
        %345 = vmatprep.subr.mxu0 0.0
        %346 = vmatpush1.msra.mxu0 0.0
        %347 = vmatprep.subr.mxu0 0.0
        %348 = vmatpush1.msra.mxu0 0.0
        %349 = vmatprep.subr.mxu0 0.0
        %350 = vmatpush1.msra.mxu0 0.0
        %351 = vmatprep.subr.mxu0 0.0
        %352 = vmatpush1.msra.mxu0 0.0
        %353 = vmatprep.subr.mxu0 0.0
        %354 = vmatpush1.msra.mxu0 0.0
        %355 = vmatprep.subr.mxu0 0.0
        %356 = vmatpush1.msra.mxu0 0.0
        %357 = vmatprep.subr.mxu0 0.0
        %358 = vmatpush1.msra.mxu0 0.0
        %359 = vmatprep.subr.mxu0 0.0
        %360 = vmatpush1.msra.mxu0 0.0
        %361 = vmatprep.subr.mxu0 0.0
        %362 = vmatpush1.msra.mxu0 0.0
        %363 = vmatprep.subr.mxu0 0.0
        %364 = vmatpush1.msra.mxu0 0.0
        %365 = vmatprep.subr.mxu0 0.0
        %366 = vmatpush1.msra.mxu0 0.0
        %367 = vmatprep.subr.mxu0 0.0
        %368 = vmatpush1.msra.mxu0 0.0
        %369 = vmatprep.subr.mxu0 0.0
        %370 = vmatpush1.msra.mxu0 0.0
        %371 = vmatprep.subr.mxu0 0.0
        %372 = vmatpush1.msra.mxu0 0.0
        %373 = vmatprep.subr.mxu0 0.0
        %374 = vmatpush1.msra.mxu0 0.0
        %375 = vmatprep.subr.mxu0 0.0
        %376 = vmatpush1.msra.mxu0 0.0
        %377 = vmatprep.subr.mxu0 0.0
        %378 = vmatpush1.msra.mxu0 0.0
        %379 = vmatprep.subr.mxu0 0.0
        %380 = vmatpush1.msra.mxu0 0.0
        %381 = vmatprep.subr.mxu0 0.0
        %382 = vmatpush1.msra.mxu0 0.0
        %383 = vmatprep.subr.mxu0 0.0
        %384 = vmatpush1.msra.mxu0 0.0
        %385 = vmatprep.subr.mxu0 0.0
        %386 = vmatpush1.msra.mxu0 0.0
        %387 = vmatprep.subr.mxu0 0.0
        %388 = vmatpush1.msra.mxu0 0.0
        %389 = vmatprep.mubr.f32.mxu0 0.0
        %390 = vmatmul.mubr.f32.gmra.mrb[0].mxu0 %v278
        %v391 = vpop.f32.mrb[0].mxu0
        %v392 = vadd.f32 %v274, %v391
        %v393 = vpop.f32.mrb[0].mxu0
        %394 = vmatprep.mubr.f32.mxu0 0.0
        %395 = vmatmul.mubr.f32.gmra.mrb[0].mxu0 %v281
        %v396 = vpop.f32.mrb[0].mxu0
        %v397 = vadd.f32 %v274, %v396
        %v398 = vpop.f32.mrb[0].mxu0
        %399 = vmatprep.mubr.f32.mxu0 0.0
        %400 = vmatmul.mubr.f32.gmra.mrb[0].mxu0 %v284
        %v401 = vpop.f32.mrb[0].mxu0
        %v402 = vadd.f32 %v274, %v401
        %v403 = vpop.f32.mrb[0].mxu0
        %404 = vmatprep.mubr.f32.mxu0 0.0
        %405 = vmatmul.mubr.f32.gmra.mrb[0].mxu0 %v287
        %v406 = vpop.f32.mrb[0].mxu0
        %v407 = vadd.f32 %v274, %v406
        %v408 = vpop.f32.mrb[0].mxu0
        %409 = vmatprep.mubr.f32.mxu0 0.0
        %410 = vmatmul.mubr.f32.gmra.mrb[0].mxu0 %v290
        %v411 = vpop.f32.mrb[0].mxu0
        %v412 = vadd.f32 %v274, %v411
        %v413 = vpop.f32.mrb[0].mxu0
        %414 = vmatprep.mubr.f32.mxu0 0.0
        %415 = vmatmul.mubr.f32.gmra.mrb[0].mxu0 %v293
        %v416 = vpop.f32.mrb[0].mxu0
        %v417 = vadd.f32 %v274, %v416
        %v418 = vpop.f32.mrb[0].mxu0
        %419 = vmatprep.mubr.f32.mxu0 0.0
        %420 = vmatmul.mubr.f32.gmra.mrb[0].mxu0 %v296
        %v421 = vpop.f32.mrb[0].mxu0
        %v422 = vadd.f32 %v274, %v421
        %v423 = vpop.f32.mrb[0].mxu0
        %424 = vmatprep.mubr.f32.mxu0 0.0
        %425 = vmatmul.mubr.f32.gmra.mrb[0].mxu0 %v299
        %v426 = vpop.f32.mrb[0].mxu0
        %v427 = vadd.f32 %v274, %v426
        %v428 = vpop.f32.mrb[0].mxu0
        %429 = vmatprep.mubr.f32.mxu0 0.0
        %430 = vmatmul.mubr.f32.gmra.mrb[0].mxu0 %v302
        %v431 = vpop.f32.mrb[0].mxu0
        %v432 = vadd.f32 %v274, %v431
        %v433 = vpop.f32.mrb[0].mxu0
        %434 = vmatprep.mubr.f32.mxu0 0.0
        %435 = vmatmul.mubr.f32.gmra.mrb[0].mxu0 %v305
        %v436 = vpop.f32.mrb[0].mxu0
        %v437 = vadd.f32 %v274, %v436
        %v438 = vpop.f32.mrb[0].mxu0
        %439 = vmatprep.mubr.f32.mxu0 0.0
        %440 = vmatmul.mubr.f32.gmra.mrb[0].mxu0 %v308
        %v441 = vpop.f32.mrb[0].mxu0
        %v442 = vadd.f32 %v274, %v441
        %v443 = vpop.f32.mrb[0].mxu0
        %444 = vmatprep.mubr.f32.mxu0 0.0
        %445 = vmatmul.mubr.f32.gmra.mrb[0].mxu0 %v311
        %v446 = vpop.f32.mrb[0].mxu0
        %v447 = vadd.f32 %v274, %v446
        %v448 = vpop.f32.mrb[0].mxu0
        %449 = vmatprep.mubr.f32.mxu0 0.0
        %450 = vmatmul.mubr.f32.gmra.mrb[0].mxu0 %v314
        %v451 = vpop.f32.mrb[0].mxu0
        %v452 = vadd.f32 %v274, %v451
        %v453 = vpop.f32.mrb[0].mxu0
        %454 = vmatprep.mubr.f32.mxu0 0.0
        %455 = vmatmul.mubr.f32.gmra.mrb[0].mxu0 %v317
        %v456 = vpop.f32.mrb[0].mxu0
        %v457 = vadd.f32 %v274, %v456
        %v458 = vpop.f32.mrb[0].mxu0
        %459 = vmatprep.mubr.f32.mxu0 0.0
        %460 = vmatmul.mubr.f32.gmra.mrb[0].mxu0 %v320
        %v461 = vpop.f32.mrb[0].mxu0
        %v462 = vadd.f32 %v274, %v461
        %v463 = vpop.f32.mrb[0].mxu0
        %464 = vmatprep.mubr.f32.mxu0 0.0
        %465 = vmatmul.mubr.f32.gmra.mrb[0].mxu0 %v323
        %v466 = vpop.f32.mrb[0].mxu0
        %v467 = vadd.f32 %v274, %v466
        %v468 = vpop.f32.mrb[0].mxu0
        %469 = vdwg.mxu0
        %v470 = vxor.u32 %v392, 2147483648
        %v471 = vxor.u32 %v397, 2147483648
        %v472 = vxor.u32 %v402, 2147483648
        %v473 = vxor.u32 %v407, 2147483648
        %v474 = vxor.u32 %v412, 2147483648
        %v475 = vxor.u32 %v417, 2147483648
        %v476 = vxor.u32 %v422, 2147483648
        %v477 = vxor.u32 %v427, 2147483648
        %v478 = vxor.u32 %v432, 2147483648
        %v479 = vxor.u32 %v437, 2147483648
        %v480 = vxor.u32 %v442, 2147483648
        %v481 = vxor.u32 %v447, 2147483648
        %v482 = vxor.u32 %v452, 2147483648
        %v483 = vxor.u32 %v457, 2147483648
        %v484 = vxor.u32 %v462, 2147483648
        %v485 = vxor.u32 %v467, 2147483648
        %v486 = vmul.f32 %v470, 1.442695
        %v487 = vpow.pop %v486
        %v488 = vmul.f32 %v471, 1.442695
        %v489 = vpow.pop %v488
        %v490 = vmul.f32 %v472, 1.442695
        %v491 = vpow.pop %v490
        %v492 = vmul.f32 %v473, 1.442695
        %v493 = vpow.pop %v492
        %v494 = vmul.f32 %v474, 1.442695
        %v495 = vpow.pop %v494
        %v496 = vmul.f32 %v475, 1.442695
        %v497 = vpow.pop %v496
        %v498 = vmul.f32 %v476, 1.442695
        %v499 = vpow.pop %v498
        %v500 = vmul.f32 %v477, 1.442695
        %v501 = vpow.pop %v500
        %v502 = vmul.f32 %v478, 1.442695
        %v503 = vpow.pop %v502
        %v504 = vmul.f32 %v479, 1.442695
        %v505 = vpow.pop %v504
        %v506 = vmul.f32 %v480, 1.442695
        %v507 = vpow.pop %v506
        %v508 = vmul.f32 %v481, 1.442695
        %v509 = vpow.pop %v508
        %v510 = vmul.f32 %v482, 1.442695
        %v511 = vpow.pop %v510
        %v512 = vmul.f32 %v483, 1.442695
        %v513 = vpow.pop %v512
        %v514 = vmul.f32 %v484, 1.442695
        %v515 = vpow.pop %v514
        %v516 = vmul.f32 %v485, 1.442695
        %v517 = vpow.pop %v516
        %v518 = vadd.f32 %v487, 1.0
        %v519 = vadd.f32 %v489, 1.0
        %v520 = vadd.f32 %v491, 1.0
        %v521 = vadd.f32 %v493, 1.0
        %v522 = vadd.f32 %v495, 1.0
        %v523 = vadd.f32 %v497, 1.0
        %v524 = vadd.f32 %v499, 1.0
        %v525 = vadd.f32 %v501, 1.0
        %v526 = vadd.f32 %v503, 1.0
        %v527 = vadd.f32 %v505, 1.0
        %v528 = vadd.f32 %v507, 1.0
        %v529 = vadd.f32 %v509, 1.0
        %v530 = vadd.f32 %v511, 1.0
        %v531 = vadd.f32 %v513, 1.0
        %v532 = vadd.f32 %v515, 1.0
        %v533 = vadd.f32 %v517, 1.0
        %v534 = vrcp.pop %v518
        %v535 = vmul.f32 1.0, %v534
        %v536 = vrcp.pop %v519
        %v537 = vmul.f32 1.0, %v536
        %v538 = vrcp.pop %v520
        %v539 = vmul.f32 1.0, %v538
        %v540 = vrcp.pop %v521
        %v541 = vmul.f32 1.0, %v540
        %v542 = vrcp.pop %v522
        %v543 = vmul.f32 1.0, %v542
        %v544 = vrcp.pop %v523
        %v545 = vmul.f32 1.0, %v544
        %v546 = vrcp.pop %v524
        %v547 = vmul.f32 1.0, %v546
        %v548 = vrcp.pop %v525
        %v549 = vmul.f32 1.0, %v548
        %v550 = vrcp.pop %v526
        %v551 = vmul.f32 1.0, %v550
        %v552 = vrcp.pop %v527
        %v553 = vmul.f32 1.0, %v552
        %v554 = vrcp.pop %v528
        %v555 = vmul.f32 1.0, %v554
        %v556 = vrcp.pop %v529
        %v557 = vmul.f32 1.0, %v556
        %v558 = vrcp.pop %v530
        %v559 = vmul.f32 1.0, %v558
        %v560 = vrcp.pop %v531
        %v561 = vmul.f32 1.0, %v560
        %v562 = vrcp.pop %v532
        %v563 = vmul.f32 1.0, %v562
        %v564 = vrcp.pop %v533
        %v565 = vmul.f32 1.0, %v564
        %v566 = vmul.f32 %v392, 1.442695
        %v567 = vpow.pop %v566
        %v568 = vmul.f32 %v397, 1.442695
        %v569 = vpow.pop %v568
        %v570 = vmul.f32 %v402, 1.442695
        %v571 = vpow.pop %v570
        %v572 = vmul.f32 %v407, 1.442695
        %v573 = vpow.pop %v572
        %v574 = vmul.f32 %v412, 1.442695
        %v575 = vpow.pop %v574
        %v576 = vmul.f32 %v417, 1.442695
        %v577 = vpow.pop %v576
        %v578 = vmul.f32 %v422, 1.442695
        %v579 = vpow.pop %v578
        %v580 = vmul.f32 %v427, 1.442695
        %v581 = vpow.pop %v580
        %v582 = vmul.f32 %v432, 1.442695
        %v583 = vpow.pop %v582
        %v584 = vmul.f32 %v437, 1.442695
        %v585 = vpow.pop %v584
        %v586 = vmul.f32 %v442, 1.442695
        %v587 = vpow.pop %v586
        %v588 = vmul.f32 %v447, 1.442695
        %v589 = vpow.pop %v588
        %v590 = vmul.f32 %v452, 1.442695
        %v591 = vpow.pop %v590
        %v592 = vmul.f32 %v457, 1.442695
        %v593 = vpow.pop %v592
        %v594 = vmul.f32 %v462, 1.442695
        %v595 = vpow.pop %v594
        %v596 = vmul.f32 %v467, 1.442695
        %v597 = vpow.pop %v596
        %v598 = vld [vmem:[%s246] sm:$0xff]
        %v599 = vld [vmem:[%s246 + $0x8] sm:$0xff]
        %v600 = vld [vmem:[%s246 + $0x10] sm:$0xff]
        %v601 = vld [vmem:[%s246 + $0x18] sm:$0xff]
        %v602 = vld [vmem:[%s246 + $0x20] sm:$0xff]
        %v603 = vld [vmem:[%s246 + $0x28] sm:$0xff]
        %v604 = vld [vmem:[%s246 + $0x30] sm:$0xff]
        %v605 = vld [vmem:[%s246 + $0x38] sm:$0xff]
        %v606 = vld [vmem:[%s246 + $0x40] sm:$0xff]
        %v607 = vld [vmem:[%s246 + $0x48] sm:$0xff]
        %v608 = vld [vmem:[%s246 + $0x50] sm:$0xff]
        %v609 = vld [vmem:[%s246 + $0x58] sm:$0xff]
        %v610 = vld [vmem:[%s246 + $0x60] sm:$0xff]
        %v611 = vld [vmem:[%s246 + $0x68] sm:$0xff]
        %v612 = vld [vmem:[%s246 + $0x70] sm:$0xff]
        %v613 = vld [vmem:[%s246 + $0x78] sm:$0xff]
        %v614 = vsub.f32 %v535, 0.5
        %v615 = vsub.f32 %v537, 0.5
        %v616 = vsub.f32 %v539, 0.5
        %v617 = vsub.f32 %v541, 0.5
        %v618 = vsub.f32 %v543, 0.5
        %v619 = vsub.f32 %v545, 0.5
        %v620 = vsub.f32 %v547, 0.5
        %v621 = vsub.f32 %v549, 0.5
        %v622 = vsub.f32 %v551, 0.5
        %v623 = vsub.f32 %v553, 0.5
        %v624 = vsub.f32 %v555, 0.5
        %v625 = vsub.f32 %v557, 0.5
        %v626 = vsub.f32 %v559, 0.5
        %v627 = vsub.f32 %v561, 0.5
        %v628 = vsub.f32 %v563, 0.5
        %v629 = vsub.f32 %v565, 0.5
        %631 = vset.pattern.permute.xlu0 2
        %632 = vperm.xlu0 %631, %v598
        %v633 = vpop.permute.xlu0 %632
        %636 = vset.pattern.permute.xlu0 2
        %637 = vperm.xlu0 %636, %v599
        %v638 = vpop.permute.xlu0 %637
        %641 = vset.pattern.permute.xlu0 2
        %642 = vperm.xlu0 %641, %v600
        %v643 = vpop.permute.xlu0 %642
        %646 = vset.pattern.permute.xlu0 2
        %647 = vperm.xlu0 %646, %v601
        %v648 = vpop.permute.xlu0 %647
        %651 = vset.pattern.permute.xlu0 2
        %652 = vperm.xlu0 %651, %v602
        %v653 = vpop.permute.xlu0 %652
        %656 = vset.pattern.permute.xlu0 2
        %657 = vperm.xlu0 %656, %v603
        %v658 = vpop.permute.xlu0 %657
        %661 = vset.pattern.permute.xlu0 2
        %662 = vperm.xlu0 %661, %v604
        %v663 = vpop.permute.xlu0 %662
        %666 = vset.pattern.permute.xlu0 2
        %667 = vperm.xlu0 %666, %v605
        %v668 = vpop.permute.xlu0 %667
        %671 = vset.pattern.permute.xlu0 2
        %672 = vperm.xlu0 %671, %v606
        %v673 = vpop.permute.xlu0 %672
        %676 = vset.pattern.permute.xlu0 2
        %677 = vperm.xlu0 %676, %v607
        %v678 = vpop.permute.xlu0 %677
        %681 = vset.pattern.permute.xlu0 2
        %682 = vperm.xlu0 %681, %v608
        %v683 = vpop.permute.xlu0 %682
        %686 = vset.pattern.permute.xlu0 2
        %687 = vperm.xlu0 %686, %v609
        %v688 = vpop.permute.xlu0 %687
        %691 = vset.pattern.permute.xlu0 2
        %692 = vperm.xlu0 %691, %v610
        %v693 = vpop.permute.xlu0 %692
        %696 = vset.pattern.permute.xlu0 2
        %697 = vperm.xlu0 %696, %v611
        %v698 = vpop.permute.xlu0 %697
        %701 = vset.pattern.permute.xlu0 2
        %702 = vperm.xlu0 %701, %v612
        %v703 = vpop.permute.xlu0 %702
        %706 = vset.pattern.permute.xlu0 2
        %707 = vperm.xlu0 %706, %v613
        %v708 = vpop.permute.xlu0 %707
        %v710 = vmul.f32 %v614, %v633
        %v711 = vmul.f32 %v615, %v638
        %v712 = vmul.f32 %v616, %v643
        %v713 = vmul.f32 %v617, %v648
        %v714 = vmul.f32 %v618, %v653
        %v715 = vmul.f32 %v619, %v658
        %v716 = vmul.f32 %v620, %v663
        %v717 = vmul.f32 %v621, %v668
        %v718 = vmul.f32 %v622, %v673
        %v719 = vmul.f32 %v623, %v678
        %v720 = vmul.f32 %v624, %v683
        %v721 = vmul.f32 %v625, %v688
        %v722 = vmul.f32 %v626, %v693
        %v723 = vmul.f32 %v627, %v698
        %v724 = vmul.f32 %v628, %v703
        %v725 = vmul.f32 %v629, %v708
        %726 = vset.pattern.permute.xlu0 0
        %727 = vperm.xlu0 %726, %v598
        %v728 = vpop.permute.xlu0 %727
        %730 = vset.pattern.permute.xlu0 0
        %731 = vperm.xlu0 %730, %v599
        %v732 = vpop.permute.xlu0 %731
        %734 = vset.pattern.permute.xlu0 0
        %735 = vperm.xlu0 %734, %v600
        %v736 = vpop.permute.xlu0 %735
        %738 = vset.pattern.permute.xlu0 0
        %739 = vperm.xlu0 %738, %v601
        %v740 = vpop.permute.xlu0 %739
        %742 = vset.pattern.permute.xlu0 0
        %743 = vperm.xlu0 %742, %v602
        %v744 = vpop.permute.xlu0 %743
        %746 = vset.pattern.permute.xlu0 0
        %747 = vperm.xlu0 %746, %v603
        %v748 = vpop.permute.xlu0 %747
        %750 = vset.pattern.permute.xlu0 0
        %751 = vperm.xlu0 %750, %v604
        %v752 = vpop.permute.xlu0 %751
        %754 = vset.pattern.permute.xlu0 0
        %755 = vperm.xlu0 %754, %v605
        %v756 = vpop.permute.xlu0 %755
        %758 = vset.pattern.permute.xlu0 0
        %759 = vperm.xlu0 %758, %v606
        %v760 = vpop.permute.xlu0 %759
        %762 = vset.pattern.permute.xlu0 0
        %763 = vperm.xlu0 %762, %v607
        %v764 = vpop.permute.xlu0 %763
        %766 = vset.pattern.permute.xlu0 0
        %767 = vperm.xlu0 %766, %v608
        %v768 = vpop.permute.xlu0 %767
        %770 = vset.pattern.permute.xlu0 0
        %771 = vperm.xlu0 %770, %v609
        %v772 = vpop.permute.xlu0 %771
        %774 = vset.pattern.permute.xlu0 0
        %775 = vperm.xlu0 %774, %v610
        %v776 = vpop.permute.xlu0 %775
        %778 = vset.pattern.permute.xlu0 0
        %779 = vperm.xlu0 %778, %v611
        %v780 = vpop.permute.xlu0 %779
        %782 = vset.pattern.permute.xlu0 0
        %783 = vperm.xlu0 %782, %v612
        %v784 = vpop.permute.xlu0 %783
        %786 = vset.pattern.permute.xlu0 0
        %787 = vperm.xlu0 %786, %v613
        %v788 = vpop.permute.xlu0 %787
        %v790 = vadd.f32 %v728, %v710
        %v791 = vadd.f32 %v732, %v711
        %v792 = vadd.f32 %v736, %v712
        %v793 = vadd.f32 %v740, %v713
        %v794 = vadd.f32 %v744, %v714
        %v795 = vadd.f32 %v748, %v715
        %v796 = vadd.f32 %v752, %v716
        %v797 = vadd.f32 %v756, %v717
        %v798 = vadd.f32 %v760, %v718
        %v799 = vadd.f32 %v764, %v719
        %v800 = vadd.f32 %v768, %v720
        %v801 = vadd.f32 %v772, %v721
        %v802 = vadd.f32 %v776, %v722
        %v803 = vadd.f32 %v780, %v723
        %v804 = vadd.f32 %v784, %v724
        %v805 = vadd.f32 %v788, %v725
        %806 = vset.pattern.permute.xlu0 1
        %807 = vperm.xlu0 %806, %v598
        %v808 = vpop.permute.xlu0 %807
        %810 = vset.pattern.permute.xlu0 1
        %811 = vperm.xlu0 %810, %v599
        %v812 = vpop.permute.xlu0 %811
        %814 = vset.pattern.permute.xlu0 1
        %815 = vperm.xlu0 %814, %v600
        %v816 = vpop.permute.xlu0 %815
        %818 = vset.pattern.permute.xlu0 1
        %819 = vperm.xlu0 %818, %v601
        %v820 = vpop.permute.xlu0 %819
        %822 = vset.pattern.permute.xlu0 1
        %823 = vperm.xlu0 %822, %v602
        %v824 = vpop.permute.xlu0 %823
        %826 = vset.pattern.permute.xlu0 1
        %827 = vperm.xlu0 %826, %v603
        %v828 = vpop.permute.xlu0 %827
        %830 = vset.pattern.permute.xlu0 1
        %831 = vperm.xlu0 %830, %v604
        %v832 = vpop.permute.xlu0 %831
        %834 = vset.pattern.permute.xlu0 1
        %835 = vperm.xlu0 %834, %v605
        %v836 = vpop.permute.xlu0 %835
        %838 = vset.pattern.permute.xlu0 1
        %839 = vperm.xlu0 %838, %v606
        %v840 = vpop.permute.xlu0 %839
        %842 = vset.pattern.permute.xlu0 1
        %843 = vperm.xlu0 %842, %v607
        %v844 = vpop.permute.xlu0 %843
        %846 = vset.pattern.permute.xlu0 1
        %847 = vperm.xlu0 %846, %v608
        %v848 = vpop.permute.xlu0 %847
        %850 = vset.pattern.permute.xlu0 1
        %851 = vperm.xlu0 %850, %v609
        %v852 = vpop.permute.xlu0 %851
        %854 = vset.pattern.permute.xlu0 1
        %855 = vperm.xlu0 %854, %v610
        %v856 = vpop.permute.xlu0 %855
        %858 = vset.pattern.permute.xlu0 1
        %859 = vperm.xlu0 %858, %v611
        %v860 = vpop.permute.xlu0 %859
        %862 = vset.pattern.permute.xlu0 1
        %863 = vperm.xlu0 %862, %v612
        %v864 = vpop.permute.xlu0 %863
        %866 = vset.pattern.permute.xlu0 1
        %867 = vperm.xlu0 %866, %v613
        %v868 = vpop.permute.xlu0 %867
        %v870 = vadd.f32 %v808, %v710
        %v871 = vadd.f32 %v812, %v711
        %v872 = vadd.f32 %v816, %v712
        %v873 = vadd.f32 %v820, %v713
        %v874 = vadd.f32 %v824, %v714
        %v875 = vadd.f32 %v828, %v715
        %v876 = vadd.f32 %v832, %v716
        %v877 = vadd.f32 %v836, %v717
        %v878 = vadd.f32 %v840, %v718
        %v879 = vadd.f32 %v844, %v719
        %v880 = vadd.f32 %v848, %v720
        %v881 = vadd.f32 %v852, %v721
        %v882 = vadd.f32 %v856, %v722
        %v883 = vadd.f32 %v860, %v723
        %v884 = vadd.f32 %v864, %v724
        %v885 = vadd.f32 %v868, %v725
        %902 = vrot.lane.b32.xlu0 %v567, 101
        %v903 = vpop.permute.xlu0 %902
        %904 = vrot.lane.b32.xlu0 %v569, 101
        %v905 = vpop.permute.xlu0 %904
        %906 = vrot.lane.b32.xlu0 %v571, 101
        %v907 = vpop.permute.xlu0 %906
        %908 = vrot.lane.b32.xlu0 %v573, 101
        %v909 = vpop.permute.xlu0 %908
        %910 = vrot.lane.b32.xlu0 %v575, 101
        %v911 = vpop.permute.xlu0 %910
        %912 = vrot.lane.b32.xlu0 %v577, 101
        %v913 = vpop.permute.xlu0 %912
        %914 = vrot.lane.b32.xlu0 %v579, 101
        %v915 = vpop.permute.xlu0 %914
        %916 = vrot.lane.b32.xlu0 %v581, 101
        %v917 = vpop.permute.xlu0 %916
        %918 = vrot.lane.b32.xlu0 %v583, 101
        %v919 = vpop.permute.xlu0 %918
        %920 = vrot.lane.b32.xlu0 %v585, 101
        %v921 = vpop.permute.xlu0 %920
        %922 = vrot.lane.b32.xlu0 %v587, 101
        %v923 = vpop.permute.xlu0 %922
        %924 = vrot.lane.b32.xlu0 %v589, 101
        %v925 = vpop.permute.xlu0 %924
        %926 = vrot.lane.b32.xlu0 %v591, 101
        %v927 = vpop.permute.xlu0 %926
        %928 = vrot.lane.b32.xlu0 %v593, 101
        %v929 = vpop.permute.xlu0 %928
        %930 = vrot.lane.b32.xlu0 %v595, 101
        %v931 = vpop.permute.xlu0 %930
        %932 = vrot.lane.b32.xlu0 %v597, 101
        %v933 = vpop.permute.xlu0 %932
        %v950 = vmul.f32 %v598, %v903
        %v951 = vmul.f32 %v599, %v905
        %v952 = vmul.f32 %v600, %v907
        %v953 = vmul.f32 %v601, %v909
        %v954 = vmul.f32 %v602, %v911
        %v955 = vmul.f32 %v603, %v913
        %v956 = vmul.f32 %v604, %v915
        %v957 = vmul.f32 %v605, %v917
        %v958 = vmul.f32 %v606, %v919
        %v959 = vmul.f32 %v607, %v921
        %v960 = vmul.f32 %v608, %v923
        %v961 = vmul.f32 %v609, %v925
        %v962 = vmul.f32 %v610, %v927
        %v963 = vmul.f32 %v611, %v929
        %v964 = vmul.f32 %v612, %v931
        %v965 = vmul.f32 %v613, %v933
        %982 = vrot.lane.b32.xlu0 %v950, 125
        %v983 = vpop.permute.xlu0 %982
        %984 = vrot.lane.b32.xlu0 %v951, 125
        %v985 = vpop.permute.xlu0 %984
        %986 = vrot.lane.b32.xlu0 %v952, 125
        %v987 = vpop.permute.xlu0 %986
        %988 = vrot.lane.b32.xlu0 %v953, 125
        %v989 = vpop.permute.xlu0 %988
        %990 = vrot.lane.b32.xlu0 %v954, 125
        %v991 = vpop.permute.xlu0 %990
        %992 = vrot.lane.b32.xlu0 %v955, 125
        %v993 = vpop.permute.xlu0 %992
        %994 = vrot.lane.b32.xlu0 %v956, 125
        %v995 = vpop.permute.xlu0 %994
        %996 = vrot.lane.b32.xlu0 %v957, 125
        %v997 = vpop.permute.xlu0 %996
        %998 = vrot.lane.b32.xlu0 %v958, 125
        %v999 = vpop.permute.xlu0 %998
        %1000 = vrot.lane.b32.xlu0 %v959, 125
        %v1001 = vpop.permute.xlu0 %1000
        %1002 = vrot.lane.b32.xlu0 %v960, 125
        %v1003 = vpop.permute.xlu0 %1002
        %1004 = vrot.lane.b32.xlu0 %v961, 125
        %v1005 = vpop.permute.xlu0 %1004
        %1006 = vrot.lane.b32.xlu0 %v962, 125
        %v1007 = vpop.permute.xlu0 %1006
        %1008 = vrot.lane.b32.xlu0 %v963, 125
        %v1009 = vpop.permute.xlu0 %1008
        %1010 = vrot.lane.b32.xlu0 %v964, 125
        %v1011 = vpop.permute.xlu0 %1010
        %1012 = vrot.lane.b32.xlu0 %v965, 125
        %v1013 = vpop.permute.xlu0 %1012
        %v1030 = vsub.f32 %v790, %v983
        %v1031 = vsub.f32 %v791, %v985
        %v1032 = vsub.f32 %v792, %v987
        %v1033 = vsub.f32 %v793, %v989
        %v1034 = vsub.f32 %v794, %v991
        %v1035 = vsub.f32 %v795, %v993
        %v1036 = vsub.f32 %v796, %v995
        %v1037 = vsub.f32 %v797, %v997
        %v1038 = vsub.f32 %v798, %v999
        %v1039 = vsub.f32 %v799, %v1001
        %v1040 = vsub.f32 %v800, %v1003
        %v1041 = vsub.f32 %v801, %v1005
        %v1042 = vsub.f32 %v802, %v1007
        %v1043 = vsub.f32 %v803, %v1009
        %v1044 = vsub.f32 %v804, %v1011
        %v1045 = vsub.f32 %v805, %v1013
        %v1046 = vmul.f32 %v1030, 0.8
        %v1047 = vmul.f32 %v1031, 0.8
        %v1048 = vmul.f32 %v1032, 0.8
        %v1049 = vmul.f32 %v1033, 0.8
        %v1050 = vmul.f32 %v1034, 0.8
        %v1051 = vmul.f32 %v1035, 0.8
        %v1052 = vmul.f32 %v1036, 0.8
        %v1053 = vmul.f32 %v1037, 0.8
        %v1054 = vmul.f32 %v1038, 0.8
        %v1055 = vmul.f32 %v1039, 0.8
        %v1056 = vmul.f32 %v1040, 0.8
        %v1057 = vmul.f32 %v1041, 0.8
        %v1058 = vmul.f32 %v1042, 0.8
        %v1059 = vmul.f32 %v1043, 0.8
        %v1060 = vmul.f32 %v1044, 0.8
        %v1061 = vmul.f32 %v1045, 0.8
        %v1062 = vsub.f32 %v870, %v983
        %v1063 = vsub.f32 %v871, %v985
        %v1064 = vsub.f32 %v872, %v987
        %v1065 = vsub.f32 %v873, %v989
        %v1066 = vsub.f32 %v874, %v991
        %v1067 = vsub.f32 %v875, %v993
        %v1068 = vsub.f32 %v876, %v995
        %v1069 = vsub.f32 %v877, %v997
        %v1070 = vsub.f32 %v878, %v999
        %v1071 = vsub.f32 %v879, %v1001
        %v1072 = vsub.f32 %v880, %v1003
        %v1073 = vsub.f32 %v881, %v1005
        %v1074 = vsub.f32 %v882, %v1007
        %v1075 = vsub.f32 %v883, %v1009
        %v1076 = vsub.f32 %v884, %v1011
        %v1077 = vsub.f32 %v885, %v1013
        %v1078 = vmul.f32 %v1062, 0.75
        %v1079 = vmul.f32 %v1063, 0.75
        %v1080 = vmul.f32 %v1064, 0.75
        %v1081 = vmul.f32 %v1065, 0.75
        %v1082 = vmul.f32 %v1066, 0.75
        %v1083 = vmul.f32 %v1067, 0.75
        %v1084 = vmul.f32 %v1068, 0.75
        %v1085 = vmul.f32 %v1069, 0.75
        %v1086 = vmul.f32 %v1070, 0.75
        %v1087 = vmul.f32 %v1071, 0.75
        %v1088 = vmul.f32 %v1072, 0.75
        %v1089 = vmul.f32 %v1073, 0.75
        %v1090 = vmul.f32 %v1074, 0.75
        %v1091 = vmul.f32 %v1075, 0.75
        %v1092 = vmul.f32 %v1076, 0.75
        %v1093 = vmul.f32 %v1077, 0.75
        %v1094 = vadd.f32 %v790, %v983
        %v1095 = vadd.f32 %v791, %v985
        %v1096 = vadd.f32 %v792, %v987
        %v1097 = vadd.f32 %v793, %v989
        %v1098 = vadd.f32 %v794, %v991
        %v1099 = vadd.f32 %v795, %v993
        %v1100 = vadd.f32 %v796, %v995
        %v1101 = vadd.f32 %v797, %v997
        %v1102 = vadd.f32 %v798, %v999
        %v1103 = vadd.f32 %v799, %v1001
        %v1104 = vadd.f32 %v800, %v1003
        %v1105 = vadd.f32 %v801, %v1005
        %v1106 = vadd.f32 %v802, %v1007
        %v1107 = vadd.f32 %v803, %v1009
        %v1108 = vadd.f32 %v804, %v1011
        %v1109 = vadd.f32 %v805, %v1013
        %v1110 = vmul.f32 %v1094, 0.8
        %v1111 = vmul.f32 %v1095, 0.8
        %v1112 = vmul.f32 %v1096, 0.8
        %v1113 = vmul.f32 %v1097, 0.8
        %v1114 = vmul.f32 %v1098, 0.8
        %v1115 = vmul.f32 %v1099, 0.8
        %v1116 = vmul.f32 %v1100, 0.8
        %v1117 = vmul.f32 %v1101, 0.8
        %v1118 = vmul.f32 %v1102, 0.8
        %v1119 = vmul.f32 %v1103, 0.8
        %v1120 = vmul.f32 %v1104, 0.8
        %v1121 = vmul.f32 %v1105, 0.8
        %v1122 = vmul.f32 %v1106, 0.8
        %v1123 = vmul.f32 %v1107, 0.8
        %v1124 = vmul.f32 %v1108, 0.8
        %v1125 = vmul.f32 %v1109, 0.8
        %v1126 = vadd.f32 %v870, %v983
        %v1127 = vadd.f32 %v871, %v985
        %v1128 = vadd.f32 %v872, %v987
        %v1129 = vadd.f32 %v873, %v989
        %v1130 = vadd.f32 %v874, %v991
        %v1131 = vadd.f32 %v875, %v993
        %v1132 = vadd.f32 %v876, %v995
        %v1133 = vadd.f32 %v877, %v997
        %v1134 = vadd.f32 %v878, %v999
        %v1135 = vadd.f32 %v879, %v1001
        %v1136 = vadd.f32 %v880, %v1003
        %v1137 = vadd.f32 %v881, %v1005
        %v1138 = vadd.f32 %v882, %v1007
        %v1139 = vadd.f32 %v883, %v1009
        %v1140 = vadd.f32 %v884, %v1011
        %v1141 = vadd.f32 %v885, %v1013
        %v1142 = vmul.f32 %v1126, 0.75
        %v1143 = vmul.f32 %v1127, 0.75
        %v1144 = vmul.f32 %v1128, 0.75
        %v1145 = vmul.f32 %v1129, 0.75
        %v1146 = vmul.f32 %v1130, 0.75
        %v1147 = vmul.f32 %v1131, 0.75
        %v1148 = vmul.f32 %v1132, 0.75
        %v1149 = vmul.f32 %v1133, 0.75
        %v1150 = vmul.f32 %v1134, 0.75
        %v1151 = vmul.f32 %v1135, 0.75
        %v1152 = vmul.f32 %v1136, 0.75
        %v1153 = vmul.f32 %v1137, 0.75
        %v1154 = vmul.f32 %v1138, 0.75
        %v1155 = vmul.f32 %v1139, 0.75
        %v1156 = vmul.f32 %v1140, 0.75
        %v1157 = vmul.f32 %v1141, 0.75
        %1174 = vrot.lane.b32.xlu0 %v1078, 126
        %v1175 = vpop.permute.xlu0 %1174
        %1176 = vrot.lane.b32.xlu0 %v1079, 126
        %v1177 = vpop.permute.xlu0 %1176
        %1178 = vrot.lane.b32.xlu0 %v1080, 126
        %v1179 = vpop.permute.xlu0 %1178
        %1180 = vrot.lane.b32.xlu0 %v1081, 126
        %v1181 = vpop.permute.xlu0 %1180
        %1182 = vrot.lane.b32.xlu0 %v1082, 126
        %v1183 = vpop.permute.xlu0 %1182
        %1184 = vrot.lane.b32.xlu0 %v1083, 126
        %v1185 = vpop.permute.xlu0 %1184
        %1186 = vrot.lane.b32.xlu0 %v1084, 126
        %v1187 = vpop.permute.xlu0 %1186
        %1188 = vrot.lane.b32.xlu0 %v1085, 126
        %v1189 = vpop.permute.xlu0 %1188
        %1190 = vrot.lane.b32.xlu0 %v1086, 126
        %v1191 = vpop.permute.xlu0 %1190
        %1192 = vrot.lane.b32.xlu0 %v1087, 126
        %v1193 = vpop.permute.xlu0 %1192
        %1194 = vrot.lane.b32.xlu0 %v1088, 126
        %v1195 = vpop.permute.xlu0 %1194
        %1196 = vrot.lane.b32.xlu0 %v1089, 126
        %v1197 = vpop.permute.xlu0 %1196
        %1198 = vrot.lane.b32.xlu0 %v1090, 126
        %v1199 = vpop.permute.xlu0 %1198
        %1200 = vrot.lane.b32.xlu0 %v1091, 126
        %v1201 = vpop.permute.xlu0 %1200
        %1202 = vrot.lane.b32.xlu0 %v1092, 126
        %v1203 = vpop.permute.xlu0 %1202
        %1204 = vrot.lane.b32.xlu0 %v1093, 126
        %v1205 = vpop.permute.xlu0 %1204
        %1238 = vrot.lane.b32.xlu0 %v1110, 2
        %v1239 = vpop.permute.xlu0 %1238
        %1240 = vrot.lane.b32.xlu0 %v1111, 2
        %v1241 = vpop.permute.xlu0 %1240
        %1242 = vrot.lane.b32.xlu0 %v1112, 2
        %v1243 = vpop.permute.xlu0 %1242
        %1244 = vrot.lane.b32.xlu0 %v1113, 2
        %v1245 = vpop.permute.xlu0 %1244
        %1246 = vrot.lane.b32.xlu0 %v1114, 2
        %v1247 = vpop.permute.xlu0 %1246
        %1248 = vrot.lane.b32.xlu0 %v1115, 2
        %v1249 = vpop.permute.xlu0 %1248
        %1250 = vrot.lane.b32.xlu0 %v1116, 2
        %v1251 = vpop.permute.xlu0 %1250
        %1252 = vrot.lane.b32.xlu0 %v1117, 2
        %v1253 = vpop.permute.xlu0 %1252
        %1254 = vrot.lane.b32.xlu0 %v1118, 2
        %v1255 = vpop.permute.xlu0 %1254
        %1256 = vrot.lane.b32.xlu0 %v1119, 2
        %v1257 = vpop.permute.xlu0 %1256
        %1258 = vrot.lane.b32.xlu0 %v1120, 2
        %v1259 = vpop.permute.xlu0 %1258
        %1260 = vrot.lane.b32.xlu0 %v1121, 2
        %v1261 = vpop.permute.xlu0 %1260
        %1262 = vrot.lane.b32.xlu0 %v1122, 2
        %v1263 = vpop.permute.xlu0 %1262
        %1264 = vrot.lane.b32.xlu0 %v1123, 2
        %v1265 = vpop.permute.xlu0 %1264
        %1266 = vrot.lane.b32.xlu0 %v1124, 2
        %v1267 = vpop.permute.xlu0 %1266
        %1268 = vrot.lane.b32.xlu0 %v1125, 2
        %v1269 = vpop.permute.xlu0 %1268
        %1302 = vrot.lane.b32.xlu0 %v535, 126
        %v1303 = vpop.permute.xlu0 %1302
        %1304 = vrot.lane.b32.xlu0 %v537, 126
        %v1305 = vpop.permute.xlu0 %1304
        %1306 = vrot.lane.b32.xlu0 %v539, 126
        %v1307 = vpop.permute.xlu0 %1306
        %1308 = vrot.lane.b32.xlu0 %v541, 126
        %v1309 = vpop.permute.xlu0 %1308
        %1310 = vrot.lane.b32.xlu0 %v543, 126
        %v1311 = vpop.permute.xlu0 %1310
        %1312 = vrot.lane.b32.xlu0 %v545, 126
        %v1313 = vpop.permute.xlu0 %1312
        %1314 = vrot.lane.b32.xlu0 %v547, 126
        %v1315 = vpop.permute.xlu0 %1314
        %1316 = vrot.lane.b32.xlu0 %v549, 126
        %v1317 = vpop.permute.xlu0 %1316
        %1318 = vrot.lane.b32.xlu0 %v551, 126
        %v1319 = vpop.permute.xlu0 %1318
        %1320 = vrot.lane.b32.xlu0 %v553, 126
        %v1321 = vpop.permute.xlu0 %1320
        %1322 = vrot.lane.b32.xlu0 %v555, 126
        %v1323 = vpop.permute.xlu0 %1322
        %1324 = vrot.lane.b32.xlu0 %v557, 126
        %v1325 = vpop.permute.xlu0 %1324
        %1326 = vrot.lane.b32.xlu0 %v559, 126
        %v1327 = vpop.permute.xlu0 %1326
        %1328 = vrot.lane.b32.xlu0 %v561, 126
        %v1329 = vpop.permute.xlu0 %1328
        %1330 = vrot.lane.b32.xlu0 %v563, 126
        %v1331 = vpop.permute.xlu0 %1330
        %1332 = vrot.lane.b32.xlu0 %v565, 126
        %v1333 = vpop.permute.xlu0 %1332
        %1366 = vrot.lane.b32.xlu0 %v1046, 11
        %v1367 = vpop.permute.xlu0 %1366
        %1368 = vrot.lane.b32.xlu0 %v1047, 11
        %v1369 = vpop.permute.xlu0 %1368
        %1370 = vrot.lane.b32.xlu0 %v1048, 11
        %v1371 = vpop.permute.xlu0 %1370
        %1372 = vrot.lane.b32.xlu0 %v1049, 11
        %v1373 = vpop.permute.xlu0 %1372
        %1374 = vrot.lane.b32.xlu0 %v1050, 11
        %v1375 = vpop.permute.xlu0 %1374
        %1376 = vrot.lane.b32.xlu0 %v1051, 11
        %v1377 = vpop.permute.xlu0 %1376
        %1378 = vrot.lane.b32.xlu0 %v1052, 11
        %v1379 = vpop.permute.xlu0 %1378
        %1380 = vrot.lane.b32.xlu0 %v1053, 11
        %v1381 = vpop.permute.xlu0 %1380
        %1382 = vrot.lane.b32.xlu0 %v1054, 11
        %v1383 = vpop.permute.xlu0 %1382
        %1384 = vrot.lane.b32.xlu0 %v1055, 11
        %v1385 = vpop.permute.xlu0 %1384
        %1386 = vrot.lane.b32.xlu0 %v1056, 11
        %v1387 = vpop.permute.xlu0 %1386
        %1388 = vrot.lane.b32.xlu0 %v1057, 11
        %v1389 = vpop.permute.xlu0 %1388
        %1390 = vrot.lane.b32.xlu0 %v1058, 11
        %v1391 = vpop.permute.xlu0 %1390
        %1392 = vrot.lane.b32.xlu0 %v1059, 11
        %v1393 = vpop.permute.xlu0 %1392
        %1394 = vrot.lane.b32.xlu0 %v1060, 11
        %v1395 = vpop.permute.xlu0 %1394
        %1396 = vrot.lane.b32.xlu0 %v1061, 11
        %v1397 = vpop.permute.xlu0 %1396
        %1414 = vrot.lane.b32.xlu0 %v1078, 9
        %v1415 = vpop.permute.xlu0 %1414
        %1416 = vrot.lane.b32.xlu0 %v1079, 9
        %v1417 = vpop.permute.xlu0 %1416
        %1418 = vrot.lane.b32.xlu0 %v1080, 9
        %v1419 = vpop.permute.xlu0 %1418
        %1420 = vrot.lane.b32.xlu0 %v1081, 9
        %v1421 = vpop.permute.xlu0 %1420
        %1422 = vrot.lane.b32.xlu0 %v1082, 9
        %v1423 = vpop.permute.xlu0 %1422
        %1424 = vrot.lane.b32.xlu0 %v1083, 9
        %v1425 = vpop.permute.xlu0 %1424
        %1426 = vrot.lane.b32.xlu0 %v1084, 9
        %v1427 = vpop.permute.xlu0 %1426
        %1428 = vrot.lane.b32.xlu0 %v1085, 9
        %v1429 = vpop.permute.xlu0 %1428
        %1430 = vrot.lane.b32.xlu0 %v1086, 9
        %v1431 = vpop.permute.xlu0 %1430
        %1432 = vrot.lane.b32.xlu0 %v1087, 9
        %v1433 = vpop.permute.xlu0 %1432
        %1434 = vrot.lane.b32.xlu0 %v1088, 9
        %v1435 = vpop.permute.xlu0 %1434
        %1436 = vrot.lane.b32.xlu0 %v1089, 9
        %v1437 = vpop.permute.xlu0 %1436
        %1438 = vrot.lane.b32.xlu0 %v1090, 9
        %v1439 = vpop.permute.xlu0 %1438
        %1440 = vrot.lane.b32.xlu0 %v1091, 9
        %v1441 = vpop.permute.xlu0 %1440
        %1442 = vrot.lane.b32.xlu0 %v1092, 9
        %v1443 = vpop.permute.xlu0 %1442
        %1444 = vrot.lane.b32.xlu0 %v1093, 9
        %v1445 = vpop.permute.xlu0 %1444
        %1462 = vrot.lane.b32.xlu0 %v1110, 13
        %v1463 = vpop.permute.xlu0 %1462
        %1464 = vrot.lane.b32.xlu0 %v1111, 13
        %v1465 = vpop.permute.xlu0 %1464
        %1466 = vrot.lane.b32.xlu0 %v1112, 13
        %v1467 = vpop.permute.xlu0 %1466
        %1468 = vrot.lane.b32.xlu0 %v1113, 13
        %v1469 = vpop.permute.xlu0 %1468
        %1470 = vrot.lane.b32.xlu0 %v1114, 13
        %v1471 = vpop.permute.xlu0 %1470
        %1472 = vrot.lane.b32.xlu0 %v1115, 13
        %v1473 = vpop.permute.xlu0 %1472
        %1474 = vrot.lane.b32.xlu0 %v1116, 13
        %v1475 = vpop.permute.xlu0 %1474
        %1476 = vrot.lane.b32.xlu0 %v1117, 13
        %v1477 = vpop.permute.xlu0 %1476
        %1478 = vrot.lane.b32.xlu0 %v1118, 13
        %v1479 = vpop.permute.xlu0 %1478
        %1480 = vrot.lane.b32.xlu0 %v1119, 13
        %v1481 = vpop.permute.xlu0 %1480
        %1482 = vrot.lane.b32.xlu0 %v1120, 13
        %v1483 = vpop.permute.xlu0 %1482
        %1484 = vrot.lane.b32.xlu0 %v1121, 13
        %v1485 = vpop.permute.xlu0 %1484
        %1486 = vrot.lane.b32.xlu0 %v1122, 13
        %v1487 = vpop.permute.xlu0 %1486
        %1488 = vrot.lane.b32.xlu0 %v1123, 13
        %v1489 = vpop.permute.xlu0 %1488
        %1490 = vrot.lane.b32.xlu0 %v1124, 13
        %v1491 = vpop.permute.xlu0 %1490
        %1492 = vrot.lane.b32.xlu0 %v1125, 13
        %v1493 = vpop.permute.xlu0 %1492
        %1526 = vrot.lane.b32.xlu0 %v1142, 11
        %v1527 = vpop.permute.xlu0 %1526
        %1528 = vrot.lane.b32.xlu0 %v1143, 11
        %v1529 = vpop.permute.xlu0 %1528
        %1530 = vrot.lane.b32.xlu0 %v1144, 11
        %v1531 = vpop.permute.xlu0 %1530
        %1532 = vrot.lane.b32.xlu0 %v1145, 11
        %v1533 = vpop.permute.xlu0 %1532
        %1534 = vrot.lane.b32.xlu0 %v1146, 11
        %v1535 = vpop.permute.xlu0 %1534
        %1536 = vrot.lane.b32.xlu0 %v1147, 11
        %v1537 = vpop.permute.xlu0 %1536
        %1538 = vrot.lane.b32.xlu0 %v1148, 11
        %v1539 = vpop.permute.xlu0 %1538
        %1540 = vrot.lane.b32.xlu0 %v1149, 11
        %v1541 = vpop.permute.xlu0 %1540
        %1542 = vrot.lane.b32.xlu0 %v1150, 11
        %v1543 = vpop.permute.xlu0 %1542
        %1544 = vrot.lane.b32.xlu0 %v1151, 11
        %v1545 = vpop.permute.xlu0 %1544
        %1546 = vrot.lane.b32.xlu0 %v1152, 11
        %v1547 = vpop.permute.xlu0 %1546
        %1548 = vrot.lane.b32.xlu0 %v1153, 11
        %v1549 = vpop.permute.xlu0 %1548
        %1550 = vrot.lane.b32.xlu0 %v1154, 11
        %v1551 = vpop.permute.xlu0 %1550
        %1552 = vrot.lane.b32.xlu0 %v1155, 11
        %v1553 = vpop.permute.xlu0 %1552
        %1554 = vrot.lane.b32.xlu0 %v1156, 11
        %v1555 = vpop.permute.xlu0 %1554
        %1556 = vrot.lane.b32.xlu0 %v1157, 11
        %v1557 = vpop.permute.xlu0 %1556
        %1574 = vrot.lane.b32.xlu0 %v535, 2
        %v1575 = vpop.permute.xlu0 %1574
        %1576 = vrot.lane.b32.xlu0 %v537, 2
        %v1577 = vpop.permute.xlu0 %1576
        %1578 = vrot.lane.b32.xlu0 %v539, 2
        %v1579 = vpop.permute.xlu0 %1578
        %1580 = vrot.lane.b32.xlu0 %v541, 2
        %v1581 = vpop.permute.xlu0 %1580
        %1582 = vrot.lane.b32.xlu0 %v543, 2
        %v1583 = vpop.permute.xlu0 %1582
        %1584 = vrot.lane.b32.xlu0 %v545, 2
        %v1585 = vpop.permute.xlu0 %1584
        %1586 = vrot.lane.b32.xlu0 %v547, 2
        %v1587 = vpop.permute.xlu0 %1586
        %1588 = vrot.lane.b32.xlu0 %v549, 2
        %v1589 = vpop.permute.xlu0 %1588
        %1590 = vrot.lane.b32.xlu0 %v551, 2
        %v1591 = vpop.permute.xlu0 %1590
        %1592 = vrot.lane.b32.xlu0 %v553, 2
        %v1593 = vpop.permute.xlu0 %1592
        %1594 = vrot.lane.b32.xlu0 %v555, 2
        %v1595 = vpop.permute.xlu0 %1594
        %1596 = vrot.lane.b32.xlu0 %v557, 2
        %v1597 = vpop.permute.xlu0 %1596
        %1598 = vrot.lane.b32.xlu0 %v559, 2
        %v1599 = vpop.permute.xlu0 %1598
        %1600 = vrot.lane.b32.xlu0 %v561, 2
        %v1601 = vpop.permute.xlu0 %1600
        %1602 = vrot.lane.b32.xlu0 %v563, 2
        %v1603 = vpop.permute.xlu0 %1602
        %1604 = vrot.lane.b32.xlu0 %v565, 2
        %v1605 = vpop.permute.xlu0 %1604
        %1622 = vrot.lane.b32.xlu0 %v1046, 22
        %v1623 = vpop.permute.xlu0 %1622
        %1624 = vrot.lane.b32.xlu0 %v1047, 22
        %v1625 = vpop.permute.xlu0 %1624
        %1626 = vrot.lane.b32.xlu0 %v1048, 22
        %v1627 = vpop.permute.xlu0 %1626
        %1628 = vrot.lane.b32.xlu0 %v1049, 22
        %v1629 = vpop.permute.xlu0 %1628
        %1630 = vrot.lane.b32.xlu0 %v1050, 22
        %v1631 = vpop.permute.xlu0 %1630
        %1632 = vrot.lane.b32.xlu0 %v1051, 22
        %v1633 = vpop.permute.xlu0 %1632
        %1634 = vrot.lane.b32.xlu0 %v1052, 22
        %v1635 = vpop.permute.xlu0 %1634
        %1636 = vrot.lane.b32.xlu0 %v1053, 22
        %v1637 = vpop.permute.xlu0 %1636
        %1638 = vrot.lane.b32.xlu0 %v1054, 22
        %v1639 = vpop.permute.xlu0 %1638
        %1640 = vrot.lane.b32.xlu0 %v1055, 22
        %v1641 = vpop.permute.xlu0 %1640
        %1642 = vrot.lane.b32.xlu0 %v1056, 22
        %v1643 = vpop.permute.xlu0 %1642
        %1644 = vrot.lane.b32.xlu0 %v1057, 22
        %v1645 = vpop.permute.xlu0 %1644
        %1646 = vrot.lane.b32.xlu0 %v1058, 22
        %v1647 = vpop.permute.xlu0 %1646
        %1648 = vrot.lane.b32.xlu0 %v1059, 22
        %v1649 = vpop.permute.xlu0 %1648
        %1650 = vrot.lane.b32.xlu0 %v1060, 22
        %v1651 = vpop.permute.xlu0 %1650
        %1652 = vrot.lane.b32.xlu0 %v1061, 22
        %v1653 = vpop.permute.xlu0 %1652
        %1670 = vrot.lane.b32.xlu0 %v1078, 20
        %v1671 = vpop.permute.xlu0 %1670
        %1672 = vrot.lane.b32.xlu0 %v1079, 20
        %v1673 = vpop.permute.xlu0 %1672
        %1674 = vrot.lane.b32.xlu0 %v1080, 20
        %v1675 = vpop.permute.xlu0 %1674
        %1676 = vrot.lane.b32.xlu0 %v1081, 20
        %v1677 = vpop.permute.xlu0 %1676
        %1678 = vrot.lane.b32.xlu0 %v1082, 20
        %v1679 = vpop.permute.xlu0 %1678
        %1680 = vrot.lane.b32.xlu0 %v1083, 20
        %v1681 = vpop.permute.xlu0 %1680
        %1682 = vrot.lane.b32.xlu0 %v1084, 20
        %v1683 = vpop.permute.xlu0 %1682
        %1684 = vrot.lane.b32.xlu0 %v1085, 20
        %v1685 = vpop.permute.xlu0 %1684
        %1686 = vrot.lane.b32.xlu0 %v1086, 20
        %v1687 = vpop.permute.xlu0 %1686
        %1688 = vrot.lane.b32.xlu0 %v1087, 20
        %v1689 = vpop.permute.xlu0 %1688
        %1690 = vrot.lane.b32.xlu0 %v1088, 20
        %v1691 = vpop.permute.xlu0 %1690
        %1692 = vrot.lane.b32.xlu0 %v1089, 20
        %v1693 = vpop.permute.xlu0 %1692
        %1694 = vrot.lane.b32.xlu0 %v1090, 20
        %v1695 = vpop.permute.xlu0 %1694
        %1696 = vrot.lane.b32.xlu0 %v1091, 20
        %v1697 = vpop.permute.xlu0 %1696
        %1698 = vrot.lane.b32.xlu0 %v1092, 20
        %v1699 = vpop.permute.xlu0 %1698
        %1700 = vrot.lane.b32.xlu0 %v1093, 20
        %v1701 = vpop.permute.xlu0 %1700
        %1718 = vrot.lane.b32.xlu0 %v1110, 24
        %v1719 = vpop.permute.xlu0 %1718
        %1720 = vrot.lane.b32.xlu0 %v1111, 24
        %v1721 = vpop.permute.xlu0 %1720
        %1722 = vrot.lane.b32.xlu0 %v1112, 24
        %v1723 = vpop.permute.xlu0 %1722
        %1724 = vrot.lane.b32.xlu0 %v1113, 24
        %v1725 = vpop.permute.xlu0 %1724
        %1726 = vrot.lane.b32.xlu0 %v1114, 24
        %v1727 = vpop.permute.xlu0 %1726
        %1728 = vrot.lane.b32.xlu0 %v1115, 24
        %v1729 = vpop.permute.xlu0 %1728
        %1730 = vrot.lane.b32.xlu0 %v1116, 24
        %v1731 = vpop.permute.xlu0 %1730
        %1732 = vrot.lane.b32.xlu0 %v1117, 24
        %v1733 = vpop.permute.xlu0 %1732
        %1734 = vrot.lane.b32.xlu0 %v1118, 24
        %v1735 = vpop.permute.xlu0 %1734
        %1736 = vrot.lane.b32.xlu0 %v1119, 24
        %v1737 = vpop.permute.xlu0 %1736
        %1738 = vrot.lane.b32.xlu0 %v1120, 24
        %v1739 = vpop.permute.xlu0 %1738
        %1740 = vrot.lane.b32.xlu0 %v1121, 24
        %v1741 = vpop.permute.xlu0 %1740
        %1742 = vrot.lane.b32.xlu0 %v1122, 24
        %v1743 = vpop.permute.xlu0 %1742
        %1744 = vrot.lane.b32.xlu0 %v1123, 24
        %v1745 = vpop.permute.xlu0 %1744
        %1746 = vrot.lane.b32.xlu0 %v1124, 24
        %v1747 = vpop.permute.xlu0 %1746
        %1748 = vrot.lane.b32.xlu0 %v1125, 24
        %v1749 = vpop.permute.xlu0 %1748
        %1766 = vrot.lane.b32.xlu0 %v1142, 22
        %v1767 = vpop.permute.xlu0 %1766
        %1768 = vrot.lane.b32.xlu0 %v1143, 22
        %v1769 = vpop.permute.xlu0 %1768
        %1770 = vrot.lane.b32.xlu0 %v1144, 22
        %v1771 = vpop.permute.xlu0 %1770
        %1772 = vrot.lane.b32.xlu0 %v1145, 22
        %v1773 = vpop.permute.xlu0 %1772
        %1774 = vrot.lane.b32.xlu0 %v1146, 22
        %v1775 = vpop.permute.xlu0 %1774
        %1776 = vrot.lane.b32.xlu0 %v1147, 22
        %v1777 = vpop.permute.xlu0 %1776
        %1778 = vrot.lane.b32.xlu0 %v1148, 22
        %v1779 = vpop.permute.xlu0 %1778
        %1780 = vrot.lane.b32.xlu0 %v1149, 22
        %v1781 = vpop.permute.xlu0 %1780
        %1782 = vrot.lane.b32.xlu0 %v1150, 22
        %v1783 = vpop.permute.xlu0 %1782
        %1784 = vrot.lane.b32.xlu0 %v1151, 22
        %v1785 = vpop.permute.xlu0 %1784
        %1786 = vrot.lane.b32.xlu0 %v1152, 22
        %v1787 = vpop.permute.xlu0 %1786
        %1788 = vrot.lane.b32.xlu0 %v1153, 22
        %v1789 = vpop.permute.xlu0 %1788
        %1790 = vrot.lane.b32.xlu0 %v1154, 22
        %v1791 = vpop.permute.xlu0 %1790
        %1792 = vrot.lane.b32.xlu0 %v1155, 22
        %v1793 = vpop.permute.xlu0 %1792
        %1794 = vrot.lane.b32.xlu0 %v1156, 22
        %v1795 = vpop.permute.xlu0 %1794
        %1796 = vrot.lane.b32.xlu0 %v1157, 22
        %v1797 = vpop.permute.xlu0 %1796
        %1814 = vrot.lane.b32.xlu0 %v535, 6
        %v1815 = vpop.permute.xlu0 %1814
        %1816 = vrot.lane.b32.xlu0 %v537, 6
        %v1817 = vpop.permute.xlu0 %1816
        %1818 = vrot.lane.b32.xlu0 %v539, 6
        %v1819 = vpop.permute.xlu0 %1818
        %1820 = vrot.lane.b32.xlu0 %v541, 6
        %v1821 = vpop.permute.xlu0 %1820
        %1822 = vrot.lane.b32.xlu0 %v543, 6
        %v1823 = vpop.permute.xlu0 %1822
        %1824 = vrot.lane.b32.xlu0 %v545, 6
        %v1825 = vpop.permute.xlu0 %1824
        %1826 = vrot.lane.b32.xlu0 %v547, 6
        %v1827 = vpop.permute.xlu0 %1826
        %1828 = vrot.lane.b32.xlu0 %v549, 6
        %v1829 = vpop.permute.xlu0 %1828
        %1830 = vrot.lane.b32.xlu0 %v551, 6
        %v1831 = vpop.permute.xlu0 %1830
        %1832 = vrot.lane.b32.xlu0 %v553, 6
        %v1833 = vpop.permute.xlu0 %1832
        %1834 = vrot.lane.b32.xlu0 %v555, 6
        %v1835 = vpop.permute.xlu0 %1834
        %1836 = vrot.lane.b32.xlu0 %v557, 6
        %v1837 = vpop.permute.xlu0 %1836
        %1838 = vrot.lane.b32.xlu0 %v559, 6
        %v1839 = vpop.permute.xlu0 %1838
        %1840 = vrot.lane.b32.xlu0 %v561, 6
        %v1841 = vpop.permute.xlu0 %1840
        %1842 = vrot.lane.b32.xlu0 %v563, 6
        %v1843 = vpop.permute.xlu0 %1842
        %1844 = vrot.lane.b32.xlu0 %v565, 6
        %v1845 = vpop.permute.xlu0 %1844
        %vm1862 = vcmask 7168
        %v1863 = vsel %vm1862, %v1046, %v1175
        %v1864 = vsel %vm1862, %v1047, %v1177
        %v1865 = vsel %vm1862, %v1048, %v1179
        %v1866 = vsel %vm1862, %v1049, %v1181
        %v1867 = vsel %vm1862, %v1050, %v1183
        %v1868 = vsel %vm1862, %v1051, %v1185
        %v1869 = vsel %vm1862, %v1052, %v1187
        %v1870 = vsel %vm1862, %v1053, %v1189
        %v1871 = vsel %vm1862, %v1054, %v1191
        %v1872 = vsel %vm1862, %v1055, %v1193
        %v1873 = vsel %vm1862, %v1056, %v1195
        %v1874 = vsel %vm1862, %v1057, %v1197
        %v1875 = vsel %vm1862, %v1058, %v1199
        %v1876 = vsel %vm1862, %v1059, %v1201
        %v1877 = vsel %vm1862, %v1060, %v1203
        %v1878 = vsel %vm1862, %v1061, %v1205
        %vm1879 = vcmask 15360
        %v1880 = vsel %vm1879, %v1863, %v1239
        %v1881 = vsel %vm1879, %v1864, %v1241
        %v1882 = vsel %vm1879, %v1865, %v1243
        %v1883 = vsel %vm1879, %v1866, %v1245
        %v1884 = vsel %vm1879, %v1867, %v1247
        %v1885 = vsel %vm1879, %v1868, %v1249
        %v1886 = vsel %vm1879, %v1869, %v1251
        %v1887 = vsel %vm1879, %v1870, %v1253
        %v1888 = vsel %vm1879, %v1871, %v1255
        %v1889 = vsel %vm1879, %v1872, %v1257
        %v1890 = vsel %vm1879, %v1873, %v1259
        %v1891 = vsel %vm1879, %v1874, %v1261
        %v1892 = vsel %vm1879, %v1875, %v1263
        %v1893 = vsel %vm1879, %v1876, %v1265
        %v1894 = vsel %vm1879, %v1877, %v1267
        %v1895 = vsel %vm1879, %v1878, %v1269
        %vm1896 = vcmask 23552
        %v1897 = vsel %vm1896, %v1880, %v1142
        %v1898 = vsel %vm1896, %v1881, %v1143
        %v1899 = vsel %vm1896, %v1882, %v1144
        %v1900 = vsel %vm1896, %v1883, %v1145
        %v1901 = vsel %vm1896, %v1884, %v1146
        %v1902 = vsel %vm1896, %v1885, %v1147
        %v1903 = vsel %vm1896, %v1886, %v1148
        %v1904 = vsel %vm1896, %v1887, %v1149
        %v1905 = vsel %vm1896, %v1888, %v1150
        %v1906 = vsel %vm1896, %v1889, %v1151
        %v1907 = vsel %vm1896, %v1890, %v1152
        %v1908 = vsel %vm1896, %v1891, %v1153
        %v1909 = vsel %vm1896, %v1892, %v1154
        %v1910 = vsel %vm1896, %v1893, %v1155
        %v1911 = vsel %vm1896, %v1894, %v1156
        %v1912 = vsel %vm1896, %v1895, %v1157
        %vm1913 = vcmask 31744
        %v1914 = vsel %vm1913, %v1897, %v1303
        %v1915 = vsel %vm1913, %v1898, %v1305
        %v1916 = vsel %vm1913, %v1899, %v1307
        %v1917 = vsel %vm1913, %v1900, %v1309
        %v1918 = vsel %vm1913, %v1901, %v1311
        %v1919 = vsel %vm1913, %v1902, %v1313
        %v1920 = vsel %vm1913, %v1903, %v1315
        %v1921 = vsel %vm1913, %v1904, %v1317
        %v1922 = vsel %vm1913, %v1905, %v1319
        %v1923 = vsel %vm1913, %v1906, %v1321
        %v1924 = vsel %vm1913, %v1907, %v1323
        %v1925 = vsel %vm1913, %v1908, %v1325
        %v1926 = vsel %vm1913, %v1909, %v1327
        %v1927 = vsel %vm1913, %v1910, %v1329
        %v1928 = vsel %vm1913, %v1911, %v1331
        %v1929 = vsel %vm1913, %v1912, %v1333
        %vm1930 = vcmask 97280
        %v1931 = vsel %vm1930, %v1914, %v1367
        %v1932 = vsel %vm1930, %v1915, %v1369
        %v1933 = vsel %vm1930, %v1916, %v1371
        %v1934 = vsel %vm1930, %v1917, %v1373
        %v1935 = vsel %vm1930, %v1918, %v1375
        %v1936 = vsel %vm1930, %v1919, %v1377
        %v1937 = vsel %vm1930, %v1920, %v1379
        %v1938 = vsel %vm1930, %v1921, %v1381
        %v1939 = vsel %vm1930, %v1922, %v1383
        %v1940 = vsel %vm1930, %v1923, %v1385
        %v1941 = vsel %vm1930, %v1924, %v1387
        %v1942 = vsel %vm1930, %v1925, %v1389
        %v1943 = vsel %vm1930, %v1926, %v1391
        %v1944 = vsel %vm1930, %v1927, %v1393
        %v1945 = vsel %vm1930, %v1928, %v1395
        %v1946 = vsel %vm1930, %v1929, %v1397
        %vm1947 = vcmask 105472
        %v1948 = vsel %vm1947, %v1931, %v1415
        %v1949 = vsel %vm1947, %v1932, %v1417
        %v1950 = vsel %vm1947, %v1933, %v1419
        %v1951 = vsel %vm1947, %v1934, %v1421
        %v1952 = vsel %vm1947, %v1935, %v1423
        %v1953 = vsel %vm1947, %v1936, %v1425
        %v1954 = vsel %vm1947, %v1937, %v1427
        %v1955 = vsel %vm1947, %v1938, %v1429
        %v1956 = vsel %vm1947, %v1939, %v1431
        %v1957 = vsel %vm1947, %v1940, %v1433
        %v1958 = vsel %vm1947, %v1941, %v1435
        %v1959 = vsel %vm1947, %v1942, %v1437
        %v1960 = vsel %vm1947, %v1943, %v1439
        %v1961 = vsel %vm1947, %v1944, %v1441
        %v1962 = vsel %vm1947, %v1945, %v1443
        %v1963 = vsel %vm1947, %v1946, %v1445
        %vm1964 = vcmask 113664
        %v1965 = vsel %vm1964, %v1948, %v1463
        %v1966 = vsel %vm1964, %v1949, %v1465
        %v1967 = vsel %vm1964, %v1950, %v1467
        %v1968 = vsel %vm1964, %v1951, %v1469
        %v1969 = vsel %vm1964, %v1952, %v1471
        %v1970 = vsel %vm1964, %v1953, %v1473
        %v1971 = vsel %vm1964, %v1954, %v1475
        %v1972 = vsel %vm1964, %v1955, %v1477
        %v1973 = vsel %vm1964, %v1956, %v1479
        %v1974 = vsel %vm1964, %v1957, %v1481
        %v1975 = vsel %vm1964, %v1958, %v1483
        %v1976 = vsel %vm1964, %v1959, %v1485
        %v1977 = vsel %vm1964, %v1960, %v1487
        %v1978 = vsel %vm1964, %v1961, %v1489
        %v1979 = vsel %vm1964, %v1962, %v1491
        %v1980 = vsel %vm1964, %v1963, %v1493
        %vm1981 = vcmask 121856
        %v1982 = vsel %vm1981, %v1965, %v1527
        %v1983 = vsel %vm1981, %v1966, %v1529
        %v1984 = vsel %vm1981, %v1967, %v1531
        %v1985 = vsel %vm1981, %v1968, %v1533
        %v1986 = vsel %vm1981, %v1969, %v1535
        %v1987 = vsel %vm1981, %v1970, %v1537
        %v1988 = vsel %vm1981, %v1971, %v1539
        %v1989 = vsel %vm1981, %v1972, %v1541
        %v1990 = vsel %vm1981, %v1973, %v1543
        %v1991 = vsel %vm1981, %v1974, %v1545
        %v1992 = vsel %vm1981, %v1975, %v1547
        %v1993 = vsel %vm1981, %v1976, %v1549
        %v1994 = vsel %vm1981, %v1977, %v1551
        %v1995 = vsel %vm1981, %v1978, %v1553
        %v1996 = vsel %vm1981, %v1979, %v1555
        %v1997 = vsel %vm1981, %v1980, %v1557
        %vm1998 = vcmask 130048
        %v1999 = vsel %vm1998, %v1982, %v1575
        %v2000 = vsel %vm1998, %v1983, %v1577
        %v2001 = vsel %vm1998, %v1984, %v1579
        %v2002 = vsel %vm1998, %v1985, %v1581
        %v2003 = vsel %vm1998, %v1986, %v1583
        %v2004 = vsel %vm1998, %v1987, %v1585
        %v2005 = vsel %vm1998, %v1988, %v1587
        %v2006 = vsel %vm1998, %v1989, %v1589
        %v2007 = vsel %vm1998, %v1990, %v1591
        %v2008 = vsel %vm1998, %v1991, %v1593
        %v2009 = vsel %vm1998, %v1992, %v1595
        %v2010 = vsel %vm1998, %v1993, %v1597
        %v2011 = vsel %vm1998, %v1994, %v1599
        %v2012 = vsel %vm1998, %v1995, %v1601
        %v2013 = vsel %vm1998, %v1996, %v1603
        %v2014 = vsel %vm1998, %v1997, %v1605
        %vm2015 = vcmask 195584
        %v2016 = vsel %vm2015, %v1999, %v1623
        %v2017 = vsel %vm2015, %v2000, %v1625
        %v2018 = vsel %vm2015, %v2001, %v1627
        %v2019 = vsel %vm2015, %v2002, %v1629
        %v2020 = vsel %vm2015, %v2003, %v1631
        %v2021 = vsel %vm2015, %v2004, %v1633
        %v2022 = vsel %vm2015, %v2005, %v1635
        %v2023 = vsel %vm2015, %v2006, %v1637
        %v2024 = vsel %vm2015, %v2007, %v1639
        %v2025 = vsel %vm2015, %v2008, %v1641
        %v2026 = vsel %vm2015, %v2009, %v1643
        %v2027 = vsel %vm2015, %v2010, %v1645
        %v2028 = vsel %vm2015, %v2011, %v1647
        %v2029 = vsel %vm2015, %v2012, %v1649
        %v2030 = vsel %vm2015, %v2013, %v1651
        %v2031 = vsel %vm2015, %v2014, %v1653
        %vm2032 = vcmask 203776
        %v2033 = vsel %vm2032, %v2016, %v1671
        %v2034 = vsel %vm2032, %v2017, %v1673
        %v2035 = vsel %vm2032, %v2018, %v1675
        %v2036 = vsel %vm2032, %v2019, %v1677
        %v2037 = vsel %vm2032, %v2020, %v1679
        %v2038 = vsel %vm2032, %v2021, %v1681
        %v2039 = vsel %vm2032, %v2022, %v1683
        %v2040 = vsel %vm2032, %v2023, %v1685
        %v2041 = vsel %vm2032, %v2024, %v1687
        %v2042 = vsel %vm2032, %v2025, %v1689
        %v2043 = vsel %vm2032, %v2026, %v1691
        %v2044 = vsel %vm2032, %v2027, %v1693
        %v2045 = vsel %vm2032, %v2028, %v1695
        %v2046 = vsel %vm2032, %v2029, %v1697
        %v2047 = vsel %vm2032, %v2030, %v1699
        %v2048 = vsel %vm2032, %v2031, %v1701
        %vm2049 = vcmask 211968
        %v2050 = vsel %vm2049, %v2033, %v1719
        %v2051 = vsel %vm2049, %v2034, %v1721
        %v2052 = vsel %vm2049, %v2035, %v1723
        %v2053 = vsel %vm2049, %v2036, %v1725
        %v2054 = vsel %vm2049, %v2037, %v1727
        %v2055 = vsel %vm2049, %v2038, %v1729
        %v2056 = vsel %vm2049, %v2039, %v1731
        %v2057 = vsel %vm2049, %v2040, %v1733
        %v2058 = vsel %vm2049, %v2041, %v1735
        %v2059 = vsel %vm2049, %v2042, %v1737
        %v2060 = vsel %vm2049, %v2043, %v1739
        %v2061 = vsel %vm2049, %v2044, %v1741
        %v2062 = vsel %vm2049, %v2045, %v1743
        %v2063 = vsel %vm2049, %v2046, %v1745
        %v2064 = vsel %vm2049, %v2047, %v1747
        %v2065 = vsel %vm2049, %v2048, %v1749
        %vm2066 = vcmask 220160
        %v2067 = vsel %vm2066, %v2050, %v1767
        %v2068 = vsel %vm2066, %v2051, %v1769
        %v2069 = vsel %vm2066, %v2052, %v1771
        %v2070 = vsel %vm2066, %v2053, %v1773
        %v2071 = vsel %vm2066, %v2054, %v1775
        %v2072 = vsel %vm2066, %v2055, %v1777
        %v2073 = vsel %vm2066, %v2056, %v1779
        %v2074 = vsel %vm2066, %v2057, %v1781
        %v2075 = vsel %vm2066, %v2058, %v1783
        %v2076 = vsel %vm2066, %v2059, %v1785
        %v2077 = vsel %vm2066, %v2060, %v1787
        %v2078 = vsel %vm2066, %v2061, %v1789
        %v2079 = vsel %vm2066, %v2062, %v1791
        %v2080 = vsel %vm2066, %v2063, %v1793
        %v2081 = vsel %vm2066, %v2064, %v1795
        %v2082 = vsel %vm2066, %v2065, %v1797
        %vm2083 = vcmask 228352
        %v2084 = vsel %vm2083, %v2067, %v1815
        %v2085 = vsel %vm2083, %v2068, %v1817
        %v2086 = vsel %vm2083, %v2069, %v1819
        %v2087 = vsel %vm2083, %v2070, %v1821
        %v2088 = vsel %vm2083, %v2071, %v1823
        %v2089 = vsel %vm2083, %v2072, %v1825
        %v2090 = vsel %vm2083, %v2073, %v1827
        %v2091 = vsel %vm2083, %v2074, %v1829
        %v2092 = vsel %vm2083, %v2075, %v1831
        %v2093 = vsel %vm2083, %v2076, %v1833
        %v2094 = vsel %vm2083, %v2077, %v1835
        %v2095 = vsel %vm2083, %v2078, %v1837
        %v2096 = vsel %vm2083, %v2079, %v1839
        %v2097 = vsel %vm2083, %v2080, %v1841
        %v2098 = vsel %vm2083, %v2081, %v1843
        %v2099 = vsel %vm2083, %v2082, %v1845
        %vm2100 = vcmask 293888
        %v2101 = vsel %vm2100, %v2084, 0.0
        %v2102 = vsel %vm2100, %v2085, 0.0
        %v2103 = vsel %vm2100, %v2086, 0.0
        %v2104 = vsel %vm2100, %v2087, 0.0
        %v2105 = vsel %vm2100, %v2088, 0.0
        %v2106 = vsel %vm2100, %v2089, 0.0
        %v2107 = vsel %vm2100, %v2090, 0.0
        %v2108 = vsel %vm2100, %v2091, 0.0
        %v2109 = vsel %vm2100, %v2092, 0.0
        %v2110 = vsel %vm2100, %v2093, 0.0
        %v2111 = vsel %vm2100, %v2094, 0.0
        %v2112 = vsel %vm2100, %v2095, 0.0
        %v2113 = vsel %vm2100, %v2096, 0.0
        %v2114 = vsel %vm2100, %v2097, 0.0
        %v2115 = vsel %vm2100, %v2098, 0.0
        %v2116 = vsel %vm2100, %v2099, 0.0
        %2117 = vst [vmem:[%s231] sm:$0xff] %v2101
        %2118 = vst [vmem:[%s231 + $0x8] sm:$0xff] %v2102
        %2119 = vst [vmem:[%s231 + $0x10] sm:$0xff] %v2103
        %2120 = vst [vmem:[%s231 + $0x18] sm:$0xff] %v2104
        %2121 = vst [vmem:[%s231 + $0x20] sm:$0xff] %v2105
        %2122 = vst [vmem:[%s231 + $0x28] sm:$0xff] %v2106
        %2123 = vst [vmem:[%s231 + $0x30] sm:$0xff] %v2107
        %2124 = vst [vmem:[%s231 + $0x38] sm:$0xff] %v2108
        %2125 = vst [vmem:[%s231 + $0x40] sm:$0xff] %v2109
        %2126 = vst [vmem:[%s231 + $0x48] sm:$0xff] %v2110
        %2127 = vst [vmem:[%s231 + $0x50] sm:$0xff] %v2111
        %2128 = vst [vmem:[%s231 + $0x58] sm:$0xff] %v2112
        %2129 = vst [vmem:[%s231 + $0x60] sm:$0xff] %v2113
        %2130 = vst [vmem:[%s231 + $0x68] sm:$0xff] %v2114
        %2131 = vst [vmem:[%s231 + $0x70] sm:$0xff] %v2115
        %2132 = vst [vmem:[%s231 + $0x78] sm:$0xff] %v2116
        %s2133 = sand.u32 %s136, 1
        %s2134 = scalar_lea.sflag [#allocation3], %s2133
        %s2135 = sand.u32 %s136, 1
        %s2136 = smul.addr %s2135, 128
        %s2137 = scalar_lea.vmem [#allocation2], %s2136
        // Predicated region
        $region37: #{tpu_custom_call.1} parent=35 // pred_check
          %p2138 = pneg %p146
        $region38: #{tpu_custom_call.1} parent=35 // pred_check_branch
          %2140 = sbr.rel (%p2138) target = $region40
        $region39: #{tpu_custom_call.1} parent=35 // pred_region
          %s2141 = smul.u32 16, %s23
          %s2143 = ssub.s32 2048, 2048
          %2144 = vsyncadd %s2134, %s2143
          %s2145 = smul.addr %s22, 48
          %s2146 = sadd.s32 %s2141, %s2145
          %s2147 = smul.addr %s2146, 128
          %s2148 = scalar_lea.hbm %s4, %s2147
          %s2149 = sshll.u32 %s2137, 4
          %s2150 = int_to_ptr.vmem [resolvable:$true] %s2149
          %2155 = dma.vmem_to_hbm [thread:$0]  %s2150, 2048, %s2148, %s2134, 128, 128, 8
        $region40: #{tpu_custom_call.1} parent=35 // pred_fallthru
          _
      $region36: #{tpu_custom_call.1} parent=5 // pred_fallthru
        _
      %p2156 = scmp.le.s32.totalorder 2, %s13
      // Predicated region
      $region41: #{tpu_custom_call.1} parent=5 // pred_check
        %p2157 = pneg %p2156
      $region42: #{tpu_custom_call.1} parent=5 // pred_check_branch
        %2159 = sbr.rel (%p2157) target = $region44
      $region43: #{tpu_custom_call.1} parent=5 // pred_region
        %s2160 = ssub.s32 %s13, 2
        // Predicated region
        $region45: #{tpu_custom_call.1} parent=43 // pred_check
          %p2161 = pneg %p152
        $region46: #{tpu_custom_call.1} parent=43 // pred_check_branch
          %2163 = sbr.rel (%p2161) target = $region48
        $region47: #{tpu_custom_call.1} parent=43 // pred_region
          %s2164 = sand.u32 %s137, 1
          %s2165 = scalar_lea.sflag [#allocation3], %s2164
          %s2166 = sand.u32 %s137, 1
          %s2167 = smul.addr %s2166, 128
          %s2168 = scalar_lea.vmem [#allocation2], %s2167
          %2169 = dma.done %s2165, 2048
        $region48: #{tpu_custom_call.1} parent=43 // pred_fallthru
          _
      $region44: #{tpu_custom_call.1} parent=5 // pred_fallthru
        _
    $region6: #{tpu_custom_call.1} parent=1 // loop_footer
      %s17 = sadd.s32 1, %s13
    $region7: #{tpu_custom_call.1} parent=1 // loop_footer_branch
      %12 = sbr.rel target = $region3
    $region8: #{tpu_custom_call.1} parent=1 // loop_exit
      _
    %2170 = vsyncpa [#allocation3], 1
    %s2171 = scalar_lea.sflag [#allocation3], 1
    %2172 = vsyncpa %s2171, 1

</llo_original>
